<compile_context>
chip_gen: v6e
topology: v6e:2x2x1
jax: 0.10.0
libtpu: 0.0.40
codegen_flags: <defaults>
</compile_context>

<pallas_src>
import functools
import math

import jax
import jax.numpy as jnp
from jax.experimental import pallas as pl
from jax.experimental.pallas import tpu as pltpu


def _pick_tile(dim, target):
    """Largest tile <= target that divides `dim` and is a multiple of 8
    (sublane granularity); falls back to the full dimension (always legal)."""
    t = min(target, dim)
    t -= t % 8
    while t >= 8:
        if dim % t == 0:
            return t
        t -= 8
    return dim


def _supports_bf16_eup():
    """bf16 exp is a win on v6e/v7x (bf16 EUP); v5e and older stay f32."""
    try:
        kind = jax.devices()[0].device_kind.lower()
    except Exception:  # pragma: no cover - defensive
        return False
    return ("v6" in kind) or ("v7" in kind)


# ---------------------------------------------------------------------------
# Kernel 1: fused K|V projection   y2d @ [Wk^T | Wv^T] + [bk | bv]  -> bf16
# ---------------------------------------------------------------------------
def _linear_kernel(x_ref, w_ref, b_ref, o_ref):
    xt = x_ref[...].astype(w_ref.dtype)          # cast to bf16 in-kernel (VPU)
    acc = jnp.dot(xt, w_ref[...], preferred_element_type=jnp.float32)
    o_ref[...] = (acc + b_ref[...]).astype(o_ref.dtype)


def _fused_linear(x2d, w, b, out_dtype, row_tile):
    R, Cin = x2d.shape
    Cout = w.shape[1]
    tr = _pick_tile(R, row_tile)
    return pl.pallas_call(
        _linear_kernel,
        out_shape=jax.ShapeDtypeStruct((R, Cout), out_dtype),
        grid_spec=pltpu.PrefetchScalarGridSpec(
            num_scalar_prefetch=0,
            grid=(R // tr,),
            in_specs=[
                pl.BlockSpec((tr, Cin), lambda i: (i, 0)),
                pl.BlockSpec((Cin, Cout), lambda i: (0, 0)),
                pl.BlockSpec((1, Cout), lambda i: (0, 0)),
            ],
            out_specs=pl.BlockSpec((tr, Cout), lambda i: (i, 0)),
        ),
        compiler_params=pltpu.CompilerParams(
            dimension_semantics=("parallel",)),
    )(x2d, w, b)


# ---------------------------------------------------------------------------
# Kernel 2: flash attention + out-projection + residual + LayerNorm
# ---------------------------------------------------------------------------
def _flash_attn_kernel(x_ref, wq_ref, bq_ref, k_ref, v_ref, wp_ref, bp_ref,
                       gamma_ref, beta_ref, o_ref,
                       q_sc, m_sc, l_sc, acc_sc, *, bf16_exp):
    kv_i = pl.program_id(2)

    # --- per-(batch, q-tile) init: project Q once, reset online-softmax state
    @pl.when(kv_i == 0)
    def _():
        xb = x_ref[0].astype(jnp.bfloat16)                      # [tq, C]
        q = jnp.dot(xb, wq_ref[...],                            # scale folded in Wq
                    preferred_element_type=jnp.float32) + bq_ref[...]
        q_sc[...] = q.astype(jnp.bfloat16)
        m_sc[...] = jnp.full_like(m_sc, -jnp.inf)
        l_sc[...] = jnp.zeros_like(l_sc)
        acc_sc[...] = jnp.zeros_like(acc_sc)

    # --- current K/V tiles (two views of the same fused [B, N, 2C] array)
    k = k_ref[0]                                                # bf16 [tk, C]
    v = v_ref[0]                                                # bf16 [tk, C]

    # scores = q . k^T   (contraction on last axes -> no explicit transpose)
    s = jax.lax.dot_general(q_sc[...], k, (((1,), (1,)), ((), ())),
                            preferred_element_type=jnp.float32)  # f32 [tq, tk]

    # --- online softmax update (f32 state; exp precision is generation-aware)
    m_prev = m_sc[...]
    m_new = jnp.maximum(m_prev, jnp.max(s, axis=-1, keepdims=True))
    alpha = jnp.exp(m_prev - m_new)                              # f32 [tq, 1]
    if bf16_exp:
        # v6e/v7x: EUP-bound at C=128 -> bf16 exp roughly doubles throughput;
        # p feeds the MXU as bf16 anyway, l/acc accumulation stays f32.
        p = jnp.exp((s - m_new).astype(jnp.bfloat16))            # bf16 [tq, tk]
        p_sum = jnp.sum(p.astype(jnp.float32), axis=-1, keepdims=True)
        p_mxu = p
    else:
        # v5e: no bf16 EUP path (and MXU-bound) -> stay f32.
        p = jnp.exp(s - m_new)                                   # f32 [tq, tk]
        p_sum = jnp.sum(p, axis=-1, keepdims=True)
        p_mxu = p.astype(jnp.bfloat16)
    l_sc[...] = alpha * l_sc[...] + p_sum
    acc_sc[...] = alpha * acc_sc[...] + jnp.dot(
        p_mxu, v, preferred_element_type=jnp.float32)
    m_sc[...] = m_new

    # --- finalize: normalize, out-projection, residual, LayerNorm
    @pl.when(kv_i == pl.num_programs(2) - 1)
    def _():
        h = acc_sc[...] * pl.reciprocal(l_sc[...], approx=True)   # f32 [tq, C]
        h = jnp.dot(h.astype(jnp.bfloat16), wp_ref[...],
                    preferred_element_type=jnp.float32) + bp_ref[...]
        xr = x_ref[0].astype(jnp.float32) + h
        mu = jnp.mean(xr, axis=-1, keepdims=True)
        var = jnp.mean((xr - mu) ** 2, axis=-1, keepdims=True)
        xn = (xr - mu) * jax.lax.rsqrt(var + jnp.float32(1e-5))
        o_ref[0] = (xn * gamma_ref[...] + beta_ref[...]).astype(o_ref.dtype)


# ---------------------------------------------------------------------------
# Wrapper
# ---------------------------------------------------------------------------
@functools.partial(jax.jit, static_argnames=("tq", "tk", "tr", "bf16_exp"))
def _attention_forward(x, y, params, *, tq, tk, tr, bf16_exp):
    """x: [B, M, C], y: [B, N, C] or None (self-attention) -> [B, M, C]."""
    if y is None:
        y = x
    B, M, C = x.shape
    _, N, _ = y.shape
    scale = 1.0 / math.sqrt(C)

    f32, bf16 = jnp.float32, jnp.bfloat16

    # One-time constant transforms (PyTorch Linear stores W as [out, in]).
    wq_s = (params["wq"].T * scale).astype(bf16)                       # [C, C]
    bq_s = (params["bq"] * scale).reshape(1, C).astype(f32)
    w_kv = jnp.concatenate([params["wk"].T, params["wv"].T], axis=1).astype(bf16)  # [C, 2C]
    b_kv = jnp.concatenate([params["bk"], params["bv"]]).reshape(1, 2 * C).astype(f32)
    wp = params["wp"].T.astype(bf16)                                   # [C, C]
    bp = params["bp"].reshape(1, C).astype(f32)
    gamma = params["ln_w"].reshape(1, C).astype(f32)
    beta = params["ln_b"].reshape(1, C).astype(f32)

    # --- fused K|V projection over flattened rows -> bf16 [B, N, 2C]
    kv2d = _fused_linear(y.reshape(B * N, C), w_kv, b_kv, bf16, tr)
    kv = kv2d.reshape(B, N, 2 * C)

    # --- flash attention (+ out proj, residual, LayerNorm)
    tq_ = _pick_tile(M, tq)
    tk_ = _pick_tile(N, tk)
    n_q, n_k = M // tq_, N // tk_

    kernel = functools.partial(_flash_attn_kernel, bf16_exp=bf16_exp)
    return pl.pallas_call(
        kernel,
        out_shape=jax.ShapeDtypeStruct((B, M, C), x.dtype),
        grid_spec=pltpu.PrefetchScalarGridSpec(
            num_scalar_prefetch=0,
            grid=(B, n_q, n_k),
            in_specs=[
                pl.BlockSpec((1, tq_, C), lambda b, qi, ki: (b, qi, 0)),    # x
                pl.BlockSpec((C, C), lambda b, qi, ki: (0, 0)),             # Wq (scaled)
                pl.BlockSpec((1, C), lambda b, qi, ki: (0, 0)),             # bq (scaled)
                pl.BlockSpec((1, tk_, C), lambda b, qi, ki: (b, ki, 0)),    # K half of kv
                pl.BlockSpec((1, tk_, C), lambda b, qi, ki: (b, ki, 1)),    # V half of kv
                pl.BlockSpec((C, C), lambda b, qi, ki: (0, 0)),             # Wp
                pl.BlockSpec((1, C), lambda b, qi, ki: (0, 0)),             # bp
                pl.BlockSpec((1, C), lambda b, qi, ki: (0, 0)),             # gamma
                pl.BlockSpec((1, C), lambda b, qi, ki: (0, 0)),             # beta
            ],
            out_specs=pl.BlockSpec((1, tq_, C), lambda b, qi, ki: (b, qi, 0)),
            scratch_shapes=[
                pltpu.VMEM((tq_, C), bf16),     # cached Q tile
                pltpu.VMEM((tq_, 1), f32),      # m (running max)
                pltpu.VMEM((tq_, 1), f32),      # l (running denom)
                pltpu.VMEM((tq_, C), f32),      # acc
            ],
        ),
        compiler_params=pltpu.CompilerParams(
            dimension_semantics=("parallel", "parallel", "arbitrary"),
            vmem_limit_bytes=48 * 1024 * 1024),
    )(x, wq_s, bq_s, kv, kv, wp, bp, gamma, beta)


def attention_forward(x, y, params, *, tq=512, tk=512, tr=2048, bf16_exp=None):
    """Public entry: picks the exp precision for the current TPU generation."""
    if bf16_exp is None:
        bf16_exp = _supports_bf16_eup()
    return _attention_forward(x, y, params, tq=tq, tk=tk, tr=tr,
                              bf16_exp=bool(bf16_exp))


# ---------------------------------------------------------------------------
# Parameter init (matches the PyTorch module's initialize()) + reference
# ---------------------------------------------------------------------------
def init_params(key, in_ch):
    kq, kk, kv, kp = jax.random.split(key, 4)
    bound = math.sqrt(6.0 / (2.0 * in_ch))          # xavier_uniform for [C, C]

    def xavier(k, gain=1.0):
        return jax.random.uniform(k, (in_ch, in_ch), dtype=jnp.float32,
                                  minval=-gain * bound, maxval=gain * bound)

    zeros_c = jnp.zeros((in_ch,), jnp.float32)
    return {
        "wq": xavier(kq), "bq": zeros_c,
        "wk": xavier(kk), "bk": zeros_c,
        "wv": xavier(kv), "bv": zeros_c,
        "wp": xavier(kp, gain=1e-5), "bp": zeros_c,
        "ln_w": jnp.ones((in_ch,), jnp.float32),
        "ln_b": jnp.zeros((in_ch,), jnp.float32),
    }


def _random_params(key, in_ch):
    """Non-degenerate params (output projection not ~0) for a stronger check."""
    ks = jax.random.split(key, 10)
    g = lambda k, shape, s: jax.random.normal(k, shape, jnp.float32) * s
    return {
        "wq": g(ks[0], (in_ch, in_ch), 0.05), "bq": g(ks[1], (in_ch,), 0.1),
        "wk": g(ks[2], (in_ch, in_ch), 0.05), "bk": g(ks[3], (in_ch,), 0.1),
        "wv": g(ks[4], (in_ch, in_ch), 0.05), "bv": g(ks[5], (in_ch,), 0.1),
        "wp": g(ks[6], (in_ch, in_ch), 0.05), "bp": g(ks[7], (in_ch,), 0.1),
        "ln_w": 1.0 + g(ks[8], (in_ch,), 0.1), "ln_b": g(ks[9], (in_ch,), 0.1),
    }


def _reference(x, y, p):
    """Pure-JAX f32 reference mirroring the PyTorch forward."""
    C = x.shape[-1]
    q = x @ p["wq"].T + p["bq"]
    k = y @ p["wk"].T + p["bk"]
    v = y @ p["wv"].T + p["bv"]
    w = jnp.einsum("bmc,bnc->bmn", q, k) * (C ** -0.5)
    w = jax.nn.softmax(w, axis=-1)
    h = jnp.einsum("bmn,bnc->bmc", w, v)
    h = h @ p["wp"].T + p["bp"]
    xr = x + h
    mean = xr.mean(-1, keepdims=True)
    var = ((xr - mean) ** 2).mean(-1, keepdims=True)
    return (xr - mean) / jnp.sqrt(var + 1e-5) * p["ln_w"] + p["ln_b"]


if __name__ == "__main__":
    key = jax.random.PRNGKey(0)
    kx, ky, kp, kr = jax.random.split(key, 4)

    # Small, lane-friendly shapes (C multiple of 128) that still exercise
    # multiple Q tiles and multiple KV tiles of the flash pipeline.
    B, M, N, C = 2, 128, 256, 128
    x = jax.random.normal(kx, (B, M, C), dtype=jnp.float32)
    y = jax.random.normal(ky, (B, N, C), dtype=jnp.float32)   # cross-attn memory

    params = init_params(kp, C)     # matches PyTorch initialize()

    # self-attention with small explicit tiles -> exercises multi-tile flash
    out_self = attention_forward(x, None, params, tq=64, tk=128)
    # cross-attention with default (large, auto-clamped) tiles
    out_cross = attention_forward(x, y, params)
    jax.block_until_ready((out_self, out_cross))

    ref_self = _reference(x, x, params)
    ref_cross = _reference(x, y, params)
    # bf16 MXU operands (and bf16 exp on v6e/v7x) -> looser tolerances
    assert jnp.allclose(out_self, ref_self, atol=5e-2, rtol=5e-2), "self-attn mismatch"
    assert jnp.allclose(out_cross, ref_cross, atol=5e-2, rtol=5e-2), "cross-attn mismatch"

    # stronger numerical check with a non-degenerate output projection
    params_r = _random_params(kr, C)
    out_r = attention_forward(x, y, params_r, tq=64, tk=128)
    jax.block_until_ready(out_r)
    ref_r = _reference(x, y, params_r)
    assert jnp.allclose(out_r, ref_r, atol=5e-2, rtol=5e-2), "randomized-params mismatch"

    print("KERNEL_OK")
</pallas_src>

<mosaic_0001>
module attributes {stable_mosaic.version = 11 : i64} {
  func.func @_linear_kernel(%arg0: i32, %arg1: memref<256x128xf32, #tpu.memory_space<vmem>>, %arg2: memref<128x256xbf16, #tpu.memory_space<vmem>>, %arg3: memref<1x256xf32, #tpu.memory_space<vmem>>, %arg4: memref<256x256xbf16, #tpu.memory_space<vmem>>) attributes {dimension_semantics = [#tpu.dimension_semantics<parallel>], iteration_bounds = array<i64: 1>, scalar_prefetch = 0 : i64, scratch_operands = 0 : i64, tpu.core_type = #tpu.core_type<tc>, window_params = [{transform_indices = @transform_0, window_bounds = array<i64: 256, 128>}, {pipeline_mode = #tpu.pipeline_mode<synchronous>, transform_indices = @transform_1, window_bounds = array<i64: 128, 256>}, {pipeline_mode = #tpu.pipeline_mode<synchronous>, transform_indices = @transform_2, window_bounds = array<i64: 1, 256>}, {transform_indices = @transform_3, window_bounds = array<i64: 256, 256>}]} {
    %c0 = arith.constant 0 : index
    %c0_0 = arith.constant 0 : index
    %0 = vector.load %arg1[%c0, %c0_0] : memref<256x128xf32, #tpu.memory_space<vmem>>, vector<256x128xf32>
    %1 = arith.truncf %0 : vector<256x128xf32> to vector<256x128xbf16>
    %c0_1 = arith.constant 0 : index
    %c0_2 = arith.constant 0 : index
    %2 = vector.load %arg2[%c0_1, %c0_2] : memref<128x256xbf16, #tpu.memory_space<vmem>>, vector<128x256xbf16>
    %cst = arith.constant dense<0.000000e+00> : vector<256x256xf32>
    %3 = tpu.matmul %1, %2, %cst {dimension_numbers = #tpu.dot_dimension_numbers<[1], [0], [0], [1], [0, 0, 1, 1], [], []>} : vector<256x128xbf16>, vector<128x256xbf16>, vector<256x256xf32> -> vector<256x256xf32>
    %c0_3 = arith.constant 0 : index
    %c0_4 = arith.constant 0 : index
    %4 = vector.load %arg3[%c0_3, %c0_4] : memref<1x256xf32, #tpu.memory_space<vmem>>, vector<1x256xf32>
    %5 = vector.broadcast %4 : vector<1x256xf32> to vector<256x256xf32>
    %6 = arith.addf %3, %5 : vector<256x256xf32>
    %7 = arith.truncf %6 : vector<256x256xf32> to vector<256x256xbf16>
    %c0_5 = arith.constant 0 : index
    %c0_6 = arith.constant 0 : index
    %8 = vector.load %arg4[%c0_5, %c0_6] : memref<256x256xbf16, #tpu.memory_space<vmem>>, vector<256x256xbf16>
    tpu.vector_store %arg4[%c0_5, %c0_6], %7 {strides = array<i32>} : memref<256x256xbf16, #tpu.memory_space<vmem>>, vector<256x256xbf16>,
    return
  }
  func.func @transform_0(%arg0: i32) -> (i32, i32) {
    %c0_i32 = arith.constant 0 : i32
    %c0_i32_0 = arith.constant 0 : i32
    return %arg0, %c0_i32 : i32, i32
  }
  func.func @transform_1(%arg0: i32) -> (i32, i32) {
    %c0_i32 = arith.constant 0 : i32
    %c0_i32_0 = arith.constant 0 : i32
    %c0_i32_1 = arith.constant 0 : i32
    return %c0_i32, %c0_i32_0 : i32, i32
  }
  func.func @transform_2(%arg0: i32) -> (i32, i32) {
    %c0_i32 = arith.constant 0 : i32
    %c0_i32_0 = arith.constant 0 : i32
    %c0_i32_1 = arith.constant 0 : i32
    return %c0_i32, %c0_i32_0 : i32, i32
  }
  func.func @transform_3(%arg0: i32) -> (i32, i32) {
    %c0_i32 = arith.constant 0 : i32
    %c0_i32_0 = arith.constant 0 : i32
    return %arg0, %c0_i32 : i32, i32
  }
}

module attributes {stable_mosaic.version = 11 : i64} {
  func.func @_flash_attn_kernel(%arg0: i32, %arg1: i32, %arg2: i32, %arg3: memref<1x64x128xf32, #tpu.memory_space<vmem>>, %arg4: memref<128x128xbf16, #tpu.memory_space<vmem>>, %arg5: memref<1x128xf32, #tpu.memory_space<vmem>>, %arg6: memref<1x128x128xbf16, #tpu.memory_space<vmem>>, %arg7: memref<1x128x128xbf16, #tpu.memory_space<vmem>>, %arg8: memref<128x128xbf16, #tpu.memory_space<vmem>>, %arg9: memref<1x128xf32, #tpu.memory_space<vmem>>, %arg10: memref<1x128xf32, #tpu.memory_space<vmem>>, %arg11: memref<1x128xf32, #tpu.memory_space<vmem>>, %arg12: memref<1x64x128xf32, #tpu.memory_space<vmem>>, %arg13: memref<64x128xbf16, #tpu.memory_space<vmem>>, %arg14: memref<64x1xf32, #tpu.memory_space<vmem>>, %arg15: memref<64x1xf32, #tpu.memory_space<vmem>>, %arg16: memref<64x128xf32, #tpu.memory_space<vmem>>) attributes {dimension_semantics = [#tpu.dimension_semantics<parallel>, #tpu.dimension_semantics<parallel>, #tpu.dimension_semantics<arbitrary>], iteration_bounds = array<i64: 2, 2, 1>, scalar_prefetch = 0 : i64, scratch_operands = 4 : i64, tpu.core_type = #tpu.core_type<tc>, window_params = [{transform_indices = @transform_0, window_bounds = array<i64: 1, 64, 128>}, {pipeline_mode = #tpu.pipeline_mode<synchronous>, transform_indices = @transform_1, window_bounds = array<i64: 128, 128>}, {pipeline_mode = #tpu.pipeline_mode<synchronous>, transform_indices = @transform_2, window_bounds = array<i64: 1, 128>}, {transform_indices = @transform_3, window_bounds = array<i64: 1, 128, 128>}, {transform_indices = @transform_4, window_bounds = array<i64: 1, 128, 128>}, {pipeline_mode = #tpu.pipeline_mode<synchronous>, transform_indices = @transform_5, window_bounds = array<i64: 128, 128>}, {pipeline_mode = #tpu.pipeline_mode<synchronous>, transform_indices = @transform_6, window_bounds = array<i64: 1, 128>}, {pipeline_mode = #tpu.pipeline_mode<synchronous>, transform_indices = @transform_7, window_bounds = array<i64: 1, 128>}, {pipeline_mode = #tpu.pipeline_mode<synchronous>, transform_indices = @transform_8, window_bounds = array<i64: 1, 128>}, {transform_indices = @transform_9, window_bounds = array<i64: 1, 64, 128>}]} {
    %c0_i32 = arith.constant 0 : i32
    %0 = arith.cmpi eq, %arg2, %c0_i32 : i32
    %1 = arith.extui %0 : i1 to i32
    %c0_i32_0 = arith.constant 0 : i32
    %2 = arith.cmpi ne, %1, %c0_i32_0 : i32
    scf.if %2 {
      %c0_25 = arith.constant 0 : index
      %c0_26 = arith.constant 0 : index
      %c0_27 = arith.constant 0 : index
      %35 = vector.load %arg3[%c0_25, %c0_26, %c0_27] : memref<1x64x128xf32, #tpu.memory_space<vmem>>, vector<1x64x128xf32>
      %36 = vector.shape_cast %35 : vector<1x64x128xf32> to vector<64x128xf32>
      %37 = arith.truncf %36 : vector<64x128xf32> to vector<64x128xbf16>
      %c0_28 = arith.constant 0 : index
      %c0_29 = arith.constant 0 : index
      %38 = vector.load %arg4[%c0_28, %c0_29] : memref<128x128xbf16, #tpu.memory_space<vmem>>, vector<128x128xbf16>
      %cst_30 = arith.constant dense<0.000000e+00> : vector<64x128xf32>
      %39 = tpu.matmul %37, %38, %cst_30 {dimension_numbers = #tpu.dot_dimension_numbers<[1], [0], [0], [1], [0, 0, 1, 1], [], []>} : vector<64x128xbf16>, vector<128x128xbf16>, vector<64x128xf32> -> vector<64x128xf32>
      %c0_31 = arith.constant 0 : index
      %c0_32 = arith.constant 0 : index
      %40 = vector.load %arg5[%c0_31, %c0_32] : memref<1x128xf32, #tpu.memory_space<vmem>>, vector<1x128xf32>
      %41 = vector.broadcast %40 : vector<1x128xf32> to vector<64x128xf32>
      %42 = arith.addf %39, %41 : vector<64x128xf32>
      %43 = arith.truncf %42 : vector<64x128xf32> to vector<64x128xbf16>
      %c0_33 = arith.constant 0 : index
      %c0_34 = arith.constant 0 : index
      %44 = vector.load %arg13[%c0_33, %c0_34] : memref<64x128xbf16, #tpu.memory_space<vmem>>, vector<64x128xbf16>
      tpu.vector_store %arg13[%c0_33, %c0_34], %43 {strides = array<i32>} : memref<64x128xbf16, #tpu.memory_space<vmem>>, vector<64x128xbf16>,
      %cst_35 = arith.constant 0xFF800000 : f32
      %45 = vector.broadcast %cst_35 : f32 to vector<64x1xf32>
      %c0_36 = arith.constant 0 : index
      %c0_37 = arith.constant 0 : index
      %46 = vector.load %arg14[%c0_36, %c0_37] : memref<64x1xf32, #tpu.memory_space<vmem>>, vector<64x1xf32>
      tpu.vector_store %arg14[%c0_36, %c0_37], %45 {strides = array<i32>} : memref<64x1xf32, #tpu.memory_space<vmem>>, vector<64x1xf32>,
      %cst_38 = arith.constant 0.000000e+00 : f32
      %47 = vector.broadcast %cst_38 : f32 to vector<64x1xf32>
      %c0_39 = arith.constant 0 : index
      %c0_40 = arith.constant 0 : index
      %48 = vector.load %arg15[%c0_39, %c0_40] : memref<64x1xf32, #tpu.memory_space<vmem>>, vector<64x1xf32>
      tpu.vector_store %arg15[%c0_39, %c0_40], %47 {strides = array<i32>} : memref<64x1xf32, #tpu.memory_space<vmem>>, vector<64x1xf32>,
      %cst_41 = arith.constant 0.000000e+00 : f32
      %49 = vector.broadcast %cst_41 : f32 to vector<64x128xf32>
      %c0_42 = arith.constant 0 : index
      %c0_43 = arith.constant 0 : index
      %50 = vector.load %arg16[%c0_42, %c0_43] : memref<64x128xf32, #tpu.memory_space<vmem>>, vector<64x128xf32>
      tpu.vector_store %arg16[%c0_42, %c0_43], %49 {strides = array<i32>} : memref<64x128xf32, #tpu.memory_space<vmem>>, vector<64x128xf32>,
    } else {
    }
    %c0 = arith.constant 0 : index
    %c0_1 = arith.constant 0 : index
    %c0_2 = arith.constant 0 : index
    %3 = vector.load %arg6[%c0, %c0_1, %c0_2] : memref<1x128x128xbf16, #tpu.memory_space<vmem>>, vector<1x128x128xbf16>
    %4 = vector.shape_cast %3 : vector<1x128x128xbf16> to vector<128x128xbf16>
    %c0_3 = arith.constant 0 : index
    %c0_4 = arith.constant 0 : index
    %c0_5 = arith.constant 0 : index
    %5 = vector.load %arg7[%c0_3, %c0_4, %c0_5] : memref<1x128x128xbf16, #tpu.memory_space<vmem>>, vector<1x128x128xbf16>
    %6 = vector.shape_cast %5 : vector<1x128x128xbf16> to vector<128x128xbf16>
    %c0_6 = arith.constant 0 : index
    %c0_7 = arith.constant 0 : index
    %7 = vector.load %arg13[%c0_6, %c0_7] : memref<64x128xbf16, #tpu.memory_space<vmem>>, vector<64x128xbf16>
    %cst = arith.constant dense<0.000000e+00> : vector<64x128xf32>
    %8 = tpu.matmul %7, %4, %cst {dimension_numbers = #tpu.dot_dimension_numbers<[1], [1], [0], [0], [0, 0, 1, 0], [], []>} : vector<64x128xbf16>, vector<128x128xbf16>, vector<64x128xf32> -> vector<64x128xf32>
    %c0_8 = arith.constant 0 : index
    %c0_9 = arith.constant 0 : index
    %9 = vector.load %arg14[%c0_8, %c0_9] : memref<64x1xf32, #tpu.memory_space<vmem>>, vector<64x1xf32>
    %cst_10 = arith.constant dense<0xFF800000> : vector<64xf32>
    %10 = vector.multi_reduction <maximumf>, %8, %cst_10 [1] : vector<64x128xf32> to vector<64xf32>
    %11 = vector.shape_cast %10 : vector<64xf32> to vector<64x1xf32>
    %12 = arith.maximumf %9, %11 : vector<64x1xf32>
    %13 = arith.subf %9, %12 : vector<64x1xf32>
    %14 = math.exp %13 : vector<64x1xf32>
    %15 = vector.broadcast %12 : vector<64x1xf32> to vector<64x128xf32>
    %16 = arith.subf %8, %15 : vector<64x128xf32>
    %17 = math.exp %16 : vector<64x128xf32>
    %cst_11 = arith.constant dense<0.000000e+00> : vector<64xf32>
    %18 = vector.multi_reduction <add>, %17, %cst_11 [1] : vector<64x128xf32> to vector<64xf32>
    %19 = vector.shape_cast %18 : vector<64xf32> to vector<64x1xf32>
    %20 = arith.truncf %17 : vector<64x128xf32> to vector<64x128xbf16>
    %c0_12 = arith.constant 0 : index
    %c0_13 = arith.constant 0 : index
    %21 = vector.load %arg15[%c0_12, %c0_13] : memref<64x1xf32, #tpu.memory_space<vmem>>, vector<64x1xf32>
    %22 = arith.mulf %14, %21 : vector<64x1xf32>
    %23 = arith.addf %22, %19 : vector<64x1xf32>
    %c0_14 = arith.constant 0 : index
    %c0_15 = arith.constant 0 : index
    %24 = vector.load %arg15[%c0_14, %c0_15] : memref<64x1xf32, #tpu.memory_space<vmem>>, vector<64x1xf32>
    tpu.vector_store %arg15[%c0_14, %c0_15], %23 {strides = array<i32>} : memref<64x1xf32, #tpu.memory_space<vmem>>, vector<64x1xf32>,
    %c0_16 = arith.constant 0 : index
    %c0_17 = arith.constant 0 : index
    %25 = vector.load %arg16[%c0_16, %c0_17] : memref<64x128xf32, #tpu.memory_space<vmem>>, vector<64x128xf32>
    %26 = vector.broadcast %14 : vector<64x1xf32> to vector<64x128xf32>
    %27 = arith.mulf %26, %25 : vector<64x128xf32>
    %cst_18 = arith.constant dense<0.000000e+00> : vector<64x128xf32>
    %28 = tpu.matmul %20, %6, %cst_18 {dimension_numbers = #tpu.dot_dimension_numbers<[1], [0], [0], [1], [0, 0, 1, 1], [], []>} : vector<64x128xbf16>, vector<128x128xbf16>, vector<64x128xf32> -> vector<64x128xf32>
    %29 = arith.addf %27, %28 : vector<64x128xf32>
    %c0_19 = arith.constant 0 : index
    %c0_20 = arith.constant 0 : index
    %30 = vector.load %arg16[%c0_19, %c0_20] : memref<64x128xf32, #tpu.memory_space<vmem>>, vector<64x128xf32>
    tpu.vector_store %arg16[%c0_19, %c0_20], %29 {strides = array<i32>} : memref<64x128xf32, #tpu.memory_space<vmem>>, vector<64x128xf32>,
    %c0_21 = arith.constant 0 : index
    %c0_22 = arith.constant 0 : index
    %31 = vector.load %arg14[%c0_21, %c0_22] : memref<64x1xf32, #tpu.memory_space<vmem>>, vector<64x1xf32>
    tpu.vector_store %arg14[%c0_21, %c0_22], %12 {strides = array<i32>} : memref<64x1xf32, #tpu.memory_space<vmem>>, vector<64x1xf32>,
    %c0_i32_23 = arith.constant 0 : i32
    %32 = arith.cmpi eq, %arg2, %c0_i32_23 : i32
    %33 = arith.extui %32 : i1 to i32
    %c0_i32_24 = arith.constant 0 : i32
    %34 = arith.cmpi ne, %33, %c0_i32_24 : i32
    scf.if %34 {
      %c0_25 = arith.constant 0 : index
      %c0_26 = arith.constant 0 : index
      %35 = vector.load %arg16[%c0_25, %c0_26] : memref<64x128xf32, #tpu.memory_space<vmem>>, vector<64x128xf32>
      %c0_27 = arith.constant 0 : index
      %c0_28 = arith.constant 0 : index
      %36 = vector.load %arg15[%c0_27, %c0_28] : memref<64x1xf32, #tpu.memory_space<vmem>>, vector<64x1xf32>
      %37 = tpu.reciprocal %36 {approx = true} : vector<64x1xf32> -> vector<64x1xf32>
      %38 = vector.broadcast %37 : vector<64x1xf32> to vector<64x128xf32>
      %39 = arith.mulf %35, %38 : vector<64x128xf32>
      %40 = arith.truncf %39 : vector<64x128xf32> to vector<64x128xbf16>
      %c0_29 = arith.constant 0 : index
      %c0_30 = arith.constant 0 : index
      %41 = vector.load %arg8[%c0_29, %c0_30] : memref<128x128xbf16, #tpu.memory_space<vmem>>, vector<128x128xbf16>
      %cst_31 = arith.constant dense<0.000000e+00> : vector<64x128xf32>
      %42 = tpu.matmul %40, %41, %cst_31 {dimension_numbers = #tpu.dot_dimension_numbers<[1], [0], [0], [1], [0, 0, 1, 1], [], []>} : vector<64x128xbf16>, vector<128x128xbf16>, vector<64x128xf32> -> vector<64x128xf32>
      %c0_32 = arith.constant 0 : index
      %c0_33 = arith.constant 0 : index
      %43 = vector.load %arg9[%c0_32, %c0_33] : memref<1x128xf32, #tpu.memory_space<vmem>>, vector<1x128xf32>
      %44 = vector.broadcast %43 : vector<1x128xf32> to vector<64x128xf32>
      %45 = arith.addf %42, %44 : vector<64x128xf32>
      %c0_34 = arith.constant 0 : index
      %c0_35 = arith.constant 0 : index
      %c0_36 = arith.constant 0 : index
      %46 = vector.load %arg3[%c0_34, %c0_35, %c0_36] : memref<1x64x128xf32, #tpu.memory_space<vmem>>, vector<1x64x128xf32>
      %47 = vector.shape_cast %46 : vector<1x64x128xf32> to vector<64x128xf32>
      %48 = arith.addf %47, %45 : vector<64x128xf32>
      %cst_37 = arith.constant dense<0.000000e+00> : vector<64xf32>
      %49 = vector.multi_reduction <add>, %48, %cst_37 [1] : vector<64x128xf32> to vector<64xf32>
      %50 = vector.shape_cast %49 : vector<64xf32> to vector<64x1xf32>
      %cst_38 = arith.constant 1.280000e+02 : f32
      %51 = vector.broadcast %cst_38 : f32 to vector<64x1xf32>
      %52 = arith.divf %50, %51 : vector<64x1xf32>
      %53 = vector.broadcast %52 : vector<64x1xf32> to vector<64x128xf32>
      %54 = arith.subf %48, %53 : vector<64x128xf32>
      %55 = arith.mulf %54, %54 : vector<64x128xf32>
      %cst_39 = arith.constant dense<0.000000e+00> : vector<64xf32>
      %56 = vector.multi_reduction <add>, %55, %cst_39 [1] : vector<64x128xf32> to vector<64xf32>
      %57 = vector.shape_cast %56 : vector<64xf32> to vector<64x1xf32>
      %cst_40 = arith.constant 1.280000e+02 : f32
      %58 = vector.broadcast %cst_40 : f32 to vector<64x1xf32>
      %59 = arith.divf %57, %58 : vector<64x1xf32>
      %60 = vector.broadcast %52 : vector<64x1xf32> to vector<64x128xf32>
      %61 = arith.subf %48, %60 : vector<64x128xf32>
      %cst_41 = arith.constant 9.99999974E-6 : f32
      %62 = vector.broadcast %cst_41 : f32 to vector<64x1xf32>
      %63 = arith.addf %59, %62 : vector<64x1xf32>
      %64 = math.rsqrt %63 : vector<64x1xf32>
      %65 = vector.broadcast %64 : vector<64x1xf32> to vector<64x128xf32>
      %66 = arith.mulf %61, %65 : vector<64x128xf32>
      %c0_42 = arith.constant 0 : index
      %c0_43 = arith.constant 0 : index
      %67 = vector.load %arg10[%c0_42, %c0_43] : memref<1x128xf32, #tpu.memory_space<vmem>>, vector<1x128xf32>
      %68 = vector.broadcast %67 : vector<1x128xf32> to vector<64x128xf32>
      %69 = arith.mulf %66, %68 : vector<64x128xf32>
      %c0_44 = arith.constant 0 : index
      %c0_45 = arith.constant 0 : index
      %70 = vector.load %arg11[%c0_44, %c0_45] : memref<1x128xf32, #tpu.memory_space<vmem>>, vector<1x128xf32>
      %71 = vector.broadcast %70 : vector<1x128xf32> to vector<64x128xf32>
      %72 = arith.addf %69, %71 : vector<64x128xf32>
      %c0_46 = arith.constant 0 : index
      %c0_47 = arith.constant 0 : index
      %c0_48 = arith.constant 0 : index
      %73 = vector.load %arg12[%c0_46, %c0_47, %c0_48] : memref<1x64x128xf32, #tpu.memory_space<vmem>>, vector<1x64x128xf32>
      %74 = vector.shape_cast %73 : vector<1x64x128xf32> to vector<64x128xf32>
      %75 = vector.shape_cast %72 : vector<64x128xf32> to vector<1x64x128xf32>
      tpu.vector_store %arg12[%c0_46, %c0_47, %c0_48], %75 {strides = array<i32>} : memref<1x64x128xf32, #tpu.memory_space<vmem>>, vector<1x64x128xf32>,
    } else {
    }
    return
  }
  func.func @transform_0(%arg0: i32, %arg1: i32, %arg2: i32) -> (i32, i32, i32) {
    %c0_i32 = arith.constant 0 : i32
    %c0_i32_0 = arith.constant 0 : i32
    return %arg0, %arg1, %c0_i32 : i32, i32, i32
  }
  func.func @transform_1(%arg0: i32, %arg1: i32, %arg2: i32) -> (i32, i32) {
    %c0_i32 = arith.constant 0 : i32
    %c0_i32_0 = arith.constant 0 : i32
    %c0_i32_1 = arith.constant 0 : i32
    return %c0_i32, %c0_i32_0 : i32, i32
  }
  func.func @transform_2(%arg0: i32, %arg1: i32, %arg2: i32) -> (i32, i32) {
    %c0_i32 = arith.constant 0 : i32
    %c0_i32_0 = arith.constant 0 : i32
    %c0_i32_1 = arith.constant 0 : i32
    return %c0_i32, %c0_i32_0 : i32, i32
  }
  func.func @transform_3(%arg0: i32, %arg1: i32, %arg2: i32) -> (i32, i32, i32) {
    %c0_i32 = arith.constant 0 : i32
    %c0_i32_0 = arith.constant 0 : i32
    return %arg0, %arg2, %c0_i32 : i32, i32, i32
  }
  func.func @transform_4(%arg0: i32, %arg1: i32, %arg2: i32) -> (i32, i32, i32) {
    %c1_i32 = arith.constant 1 : i32
    %c0_i32 = arith.constant 0 : i32
    return %arg0, %arg2, %c1_i32 : i32, i32, i32
  }
  func.func @transform_5(%arg0: i32, %arg1: i32, %arg2: i32) -> (i32, i32) {
    %c0_i32 = arith.constant 0 : i32
    %c0_i32_0 = arith.constant 0 : i32
    %c0_i32_1 = arith.constant 0 : i32
    return %c0_i32, %c0_i32_0 : i32, i32
  }
  func.func @transform_6(%arg0: i32, %arg1: i32, %arg2: i32) -> (i32, i32) {
    %c0_i32 = arith.constant 0 : i32
    %c0_i32_0 = arith.constant 0 : i32
    %c0_i32_1 = arith.constant 0 : i32
    return %c0_i32, %c0_i32_0 : i32, i32
  }
  func.func @transform_7(%arg0: i32, %arg1: i32, %arg2: i32) -> (i32, i32) {
    %c0_i32 = arith.constant 0 : i32
    %c0_i32_0 = arith.constant 0 : i32
    %c0_i32_1 = arith.constant 0 : i32
    return %c0_i32, %c0_i32_0 : i32, i32
  }
  func.func @transform_8(%arg0: i32, %arg1: i32, %arg2: i32) -> (i32, i32) {
    %c0_i32 = arith.constant 0 : i32
    %c0_i32_0 = arith.constant 0 : i32
    %c0_i32_1 = arith.constant 0 : i32
    return %c0_i32, %c0_i32_0 : i32, i32
  }
  func.func @transform_9(%arg0: i32, %arg1: i32, %arg2: i32) -> (i32, i32, i32) {
    %c0_i32 = arith.constant 0 : i32
    %c0_i32_0 = arith.constant 0 : i32
    return %arg0, %arg1, %c0_i32 : i32, i32, i32
  }
}

</mosaic_0001>

<llo_original>
// kernel: _attention_forward.2
$region0: #{_attention_forward.2}
  #allocation0 [shape = 'u32[]', space=smem, size = 0x4, offset = 0x4, fixed_abs, tag = 'smem constant byte address 0x4 - core index']
  #allocation1 [shape = 'u32[144,128]{1,0:T(1,128)}', space=vmem, size = 0x12000, scoped, tag = 'internal scratch']
  %s0 = inlined_call_operand.vmem [shape: f32[256,128], index: 0, kind: input, shape index: {}]
  %s1 = inlined_call_operand.vmem [shape: bf16[128,256], index: 1, kind: input, shape index: {}]
  %s2 = inlined_call_operand.vmem [shape: f32[1,256], index: 2, kind: input, shape index: {}]
  %s3 = inlined_call_operand.vmem [shape: bf16[256,256], index: 3, kind: output, shape index: {}]
  %s4 = sld [smem:[#allocation0]]
  $region22: #{_attention_forward.2} parent=0
    _
  %s6 = ssub.s32 1, %s4
  %s7 = scalar_select 0, %s6, %s4
  // Predicated region
  $region2: #{_attention_forward.2} parent=0 // pred_check
    _
  $region3: #{_attention_forward.2} parent=0 // pred_check_branch
    %9 = sbr.rel (0) target = $region5
  $region4: #{_attention_forward.2} parent=0 // pred_region
    _
  $region5: #{_attention_forward.2} parent=0 // pred_fallthru
    _
  // Predicated region
  $region6: #{_attention_forward.2} parent=0 // pred_check
    _
  $region7: #{_attention_forward.2} parent=0 // pred_check_branch
    %11 = sbr.rel (0) target = $region9
  $region8: #{_attention_forward.2} parent=0 // pred_region
    _
  $region9: #{_attention_forward.2} parent=0 // pred_fallthru
    _
  // Predicated region
  $region10: #{_attention_forward.2} parent=0 // pred_check
    _
  $region11: #{_attention_forward.2} parent=0 // pred_check_branch
    %13 = sbr.rel (0) target = $region13
  $region12: #{_attention_forward.2} parent=0 // pred_region
    _
  $region13: #{_attention_forward.2} parent=0 // pred_fallthru
    _
  %v15 = vld [vmem:[%s0] sm:$0xff]
  %v16 = vld [vmem:[%s0 + $0x8] sm:$0xff]
  %v17 = vld [vmem:[%s0 + $0x10] sm:$0xff]
  %v18 = vld [vmem:[%s0 + $0x18] sm:$0xff]
  %v19 = vld [vmem:[%s0 + $0x20] sm:$0xff]
  %v20 = vld [vmem:[%s0 + $0x28] sm:$0xff]
  %v21 = vld [vmem:[%s0 + $0x30] sm:$0xff]
  %v22 = vld [vmem:[%s0 + $0x38] sm:$0xff]
  %v23 = vld [vmem:[%s0 + $0x40] sm:$0xff]
  %v24 = vld [vmem:[%s0 + $0x48] sm:$0xff]
  %v25 = vld [vmem:[%s0 + $0x50] sm:$0xff]
  %v26 = vld [vmem:[%s0 + $0x58] sm:$0xff]
  %v27 = vld [vmem:[%s0 + $0x60] sm:$0xff]
  %v28 = vld [vmem:[%s0 + $0x68] sm:$0xff]
  %v29 = vld [vmem:[%s0 + $0x70] sm:$0xff]
  %v30 = vld [vmem:[%s0 + $0x78] sm:$0xff]
  %v31 = vld [vmem:[%s0 + $0x80] sm:$0xff]
  %v32 = vld [vmem:[%s0 + $0x88] sm:$0xff]
  %v33 = vld [vmem:[%s0 + $0x90] sm:$0xff]
  %v34 = vld [vmem:[%s0 + $0x98] sm:$0xff]
  %v35 = vld [vmem:[%s0 + $0xa0] sm:$0xff]
  %v36 = vld [vmem:[%s0 + $0xa8] sm:$0xff]
  %v37 = vld [vmem:[%s0 + $0xb0] sm:$0xff]
  %v38 = vld [vmem:[%s0 + $0xb8] sm:$0xff]
  %v39 = vld [vmem:[%s0 + $0xc0] sm:$0xff]
  %v40 = vld [vmem:[%s0 + $0xc8] sm:$0xff]
  %v41 = vld [vmem:[%s0 + $0xd0] sm:$0xff]
  %v42 = vld [vmem:[%s0 + $0xd8] sm:$0xff]
  %v43 = vld [vmem:[%s0 + $0xe0] sm:$0xff]
  %v44 = vld [vmem:[%s0 + $0xe8] sm:$0xff]
  %v45 = vld [vmem:[%s0 + $0xf0] sm:$0xff]
  %v46 = vld [vmem:[%s0 + $0xf8] sm:$0xff]
  %v47 = vpack.c.bf16 %v16, %v15
  %v48 = vpack.c.bf16 %v18, %v17
  %v49 = vpack.c.bf16 %v20, %v19
  %v50 = vpack.c.bf16 %v22, %v21
  %v51 = vpack.c.bf16 %v24, %v23
  %v52 = vpack.c.bf16 %v26, %v25
  %v53 = vpack.c.bf16 %v28, %v27
  %v54 = vpack.c.bf16 %v30, %v29
  %v55 = vpack.c.bf16 %v32, %v31
  %v56 = vpack.c.bf16 %v34, %v33
  %v57 = vpack.c.bf16 %v36, %v35
  %v58 = vpack.c.bf16 %v38, %v37
  %v59 = vpack.c.bf16 %v40, %v39
  %v60 = vpack.c.bf16 %v42, %v41
  %v61 = vpack.c.bf16 %v44, %v43
  %v62 = vpack.c.bf16 %v46, %v45
  %v63 = vld [vmem:[%s1] sm:$0xff]
  %v64 = vld [vmem:[%s1 + $0x8] sm:$0xff]
  %v65 = vld [vmem:[%s1 + $0x10] sm:$0xff]
  %v66 = vld [vmem:[%s1 + $0x18] sm:$0xff]
  %v67 = vld [vmem:[%s1 + $0x20] sm:$0xff]
  %v68 = vld [vmem:[%s1 + $0x28] sm:$0xff]
  %v69 = vld [vmem:[%s1 + $0x30] sm:$0xff]
  %v70 = vld [vmem:[%s1 + $0x38] sm:$0xff]
  %v71 = vld [vmem:[%s1 + $0x40] sm:$0xff]
  %v72 = vld [vmem:[%s1 + $0x48] sm:$0xff]
  %v73 = vld [vmem:[%s1 + $0x50] sm:$0xff]
  %v74 = vld [vmem:[%s1 + $0x58] sm:$0xff]
  %v75 = vld [vmem:[%s1 + $0x60] sm:$0xff]
  %v76 = vld [vmem:[%s1 + $0x68] sm:$0xff]
  %v77 = vld [vmem:[%s1 + $0x70] sm:$0xff]
  %v78 = vld [vmem:[%s1 + $0x78] sm:$0xff]
  %v79 = vld [vmem:[%s2] sm:$0x3]
  %v81 = vlaneseq
  %v82 = vshrl.u32 %v81, 7
  %v83 = vsub.s32 0, %v82
  %v84 = vrot.slane %v79, %v83
  %v85 = vlaneseq
  %v86 = vshrl.u32 %v85, 7
  %v87 = vsub.s32 1, %v86
  %v88 = vrot.slane %v79, %v87
  %v107 = vunpack.c.l.b16 %v63
  %v108 = vunpack.c.h.b16 %v63
  %v109 = vunpack.c.l.b16 %v64
  %v110 = vunpack.c.h.b16 %v64
  %v111 = vunpack.c.l.b16 %v65
  %v112 = vunpack.c.h.b16 %v65
  %v113 = vunpack.c.l.b16 %v66
  %v114 = vunpack.c.h.b16 %v66
  %v115 = vunpack.c.l.b16 %v67
  %v116 = vunpack.c.h.b16 %v67
  %v117 = vunpack.c.l.b16 %v68
  %v118 = vunpack.c.h.b16 %v68
  %v119 = vunpack.c.l.b16 %v69
  %v120 = vunpack.c.h.b16 %v69
  %v121 = vunpack.c.l.b16 %v70
  %v122 = vunpack.c.h.b16 %v70
  %v123 = vunpack.c.l.b16 %v71
  %v124 = vunpack.c.h.b16 %v71
  %v125 = vunpack.c.l.b16 %v72
  %v126 = vunpack.c.h.b16 %v72
  %v127 = vunpack.c.l.b16 %v73
  %v128 = vunpack.c.h.b16 %v73
  %v129 = vunpack.c.l.b16 %v74
  %v130 = vunpack.c.h.b16 %v74
  %v131 = vunpack.c.l.b16 %v75
  %v132 = vunpack.c.h.b16 %v75
  %v133 = vunpack.c.l.b16 %v76
  %v134 = vunpack.c.h.b16 %v76
  %v135 = vunpack.c.l.b16 %v77
  %v136 = vunpack.c.h.b16 %v77
  %v137 = vunpack.c.l.b16 %v78
  %v138 = vunpack.c.h.b16 %v78
  %v139 = vpack.c.b16 %v109, %v107
  %v140 = vpack.c.b16 %v110, %v108
  %v141 = vpack.c.b16 %v113, %v111
  %v142 = vpack.c.b16 %v114, %v112
  %v143 = vpack.c.b16 %v117, %v115
  %v144 = vpack.c.b16 %v118, %v116
  %v145 = vpack.c.b16 %v121, %v119
  %v146 = vpack.c.b16 %v122, %v120
  %v147 = vpack.c.b16 %v125, %v123
  %v148 = vpack.c.b16 %v126, %v124
  %v149 = vpack.c.b16 %v129, %v127
  %v150 = vpack.c.b16 %v130, %v128
  %v151 = vpack.c.b16 %v133, %v131
  %v152 = vpack.c.b16 %v134, %v132
  %v153 = vpack.c.b16 %v137, %v135
  %v154 = vpack.c.b16 %v138, %v136
  %171 = vmatprep.subr.bf16.mxu0 %v154
  %172 = vmatpush1.bf16.msra.mxu0 %v153
  %173 = vmatprep.subr.bf16.mxu0 %v152
  %174 = vmatpush1.bf16.msra.mxu0 %v151
  %175 = vmatprep.subr.bf16.mxu0 %v150
  %176 = vmatpush1.bf16.msra.mxu0 %v149
  %177 = vmatprep.subr.bf16.mxu0 %v148
  %178 = vmatpush1.bf16.msra.mxu0 %v147
  %179 = vmatprep.subr.bf16.mxu0 %v146
  %180 = vmatpush1.bf16.msra.mxu0 %v145
  %181 = vmatprep.subr.bf16.mxu0 %v144
  %182 = vmatpush1.bf16.msra.mxu0 %v143
  %183 = vmatprep.subr.bf16.mxu0 %v142
  %184 = vmatpush1.bf16.msra.mxu0 %v141
  %185 = vmatprep.subr.bf16.mxu0 %v140
  %186 = vmatpush1.bf16.msra.mxu0 %v139
  %187 = vmatprep.subr.bf16.mxu0 0
  %188 = vmatpush2.bf16.msra.mxu0 0
  %189 = vmatprep.subr.bf16.mxu0 0
  %190 = vmatpush2.bf16.msra.mxu0 0
  %191 = vmatprep.subr.bf16.mxu0 0
  %192 = vmatpush2.bf16.msra.mxu0 0
  %193 = vmatprep.subr.bf16.mxu0 0
  %194 = vmatpush2.bf16.msra.mxu0 0
  %195 = vmatprep.subr.bf16.mxu0 0
  %196 = vmatpush2.bf16.msra.mxu0 0
  %197 = vmatprep.subr.bf16.mxu0 0
  %198 = vmatpush2.bf16.msra.mxu0 0
  %199 = vmatprep.subr.bf16.mxu0 0
  %200 = vmatpush2.bf16.msra.mxu0 0
  %201 = vmatprep.subr.bf16.mxu0 0
  %202 = vmatpush2.bf16.msra.mxu0 0
  %203 = vmatprep.mubr.bf16.mxu0 0
  %204 = vmatmul.mubr.bf16.gmra.mxu0 %v47
  %v205 = vpop.f32.mrf.mxu0
  %v206 = vadd.f32 %v84, %v205
  %v207 = vpop.f32.mrf.mxu0
  %v208 = vadd.f32 %v88, %v207
  %v209 = vpop.f32.mrf.mxu0
  %v210 = vadd.f32 %v84, %v209
  %v211 = vpop.f32.mrf.mxu0
  %v212 = vadd.f32 %v88, %v211
  %213 = vmatprep.mubr.bf16.mxu0 0
  %214 = vmatmul.mubr.bf16.gmra.mxu0 %v48
  %v215 = vpop.f32.mrf.mxu0
  %v216 = vadd.f32 %v84, %v215
  %v217 = vpop.f32.mrf.mxu0
  %v218 = vadd.f32 %v88, %v217
  %v219 = vpop.f32.mrf.mxu0
  %v220 = vadd.f32 %v84, %v219
  %v221 = vpop.f32.mrf.mxu0
  %v222 = vadd.f32 %v88, %v221
  %223 = vmatprep.mubr.bf16.mxu0 0
  %224 = vmatmul.mubr.bf16.gmra.mxu0 %v49
  %v225 = vpop.f32.mrf.mxu0
  %v226 = vadd.f32 %v84, %v225
  %v227 = vpop.f32.mrf.mxu0
  %v228 = vadd.f32 %v88, %v227
  %v229 = vpop.f32.mrf.mxu0
  %v230 = vadd.f32 %v84, %v229
  %v231 = vpop.f32.mrf.mxu0
  %v232 = vadd.f32 %v88, %v231
  %233 = vmatprep.mubr.bf16.mxu0 0
  %234 = vmatmul.mubr.bf16.gmra.mxu0 %v50
  %v235 = vpop.f32.mrf.mxu0
  %v236 = vadd.f32 %v84, %v235
  %v237 = vpop.f32.mrf.mxu0
  %v238 = vadd.f32 %v88, %v237
  %v239 = vpop.f32.mrf.mxu0
  %v240 = vadd.f32 %v84, %v239
  %v241 = vpop.f32.mrf.mxu0
  %v242 = vadd.f32 %v88, %v241
  %243 = vmatprep.mubr.bf16.mxu0 0
  %244 = vmatmul.mubr.bf16.gmra.mxu0 %v51
  %v245 = vpop.f32.mrf.mxu0
  %v246 = vadd.f32 %v84, %v245
  %v247 = vpop.f32.mrf.mxu0
  %v248 = vadd.f32 %v88, %v247
  %v249 = vpop.f32.mrf.mxu0
  %v250 = vadd.f32 %v84, %v249
  %v251 = vpop.f32.mrf.mxu0
  %v252 = vadd.f32 %v88, %v251
  %253 = vmatprep.mubr.bf16.mxu0 0
  %254 = vmatmul.mubr.bf16.gmra.mxu0 %v52
  %v255 = vpop.f32.mrf.mxu0
  %v256 = vadd.f32 %v84, %v255
  %v257 = vpop.f32.mrf.mxu0
  %v258 = vadd.f32 %v88, %v257
  %v259 = vpop.f32.mrf.mxu0
  %v260 = vadd.f32 %v84, %v259
  %v261 = vpop.f32.mrf.mxu0
  %v262 = vadd.f32 %v88, %v261
  %263 = vmatprep.mubr.bf16.mxu0 0
  %264 = vmatmul.mubr.bf16.gmra.mxu0 %v53
  %v265 = vpop.f32.mrf.mxu0
  %v266 = vadd.f32 %v84, %v265
  %v267 = vpop.f32.mrf.mxu0
  %v268 = vadd.f32 %v88, %v267
  %v269 = vpop.f32.mrf.mxu0
  %v270 = vadd.f32 %v84, %v269
  %v271 = vpop.f32.mrf.mxu0
  %v272 = vadd.f32 %v88, %v271
  %273 = vmatprep.mubr.bf16.mxu0 0
  %274 = vmatmul.mubr.bf16.gmra.mxu0 %v54
  %v275 = vpop.f32.mrf.mxu0
  %v276 = vadd.f32 %v84, %v275
  %v277 = vpop.f32.mrf.mxu0
  %v278 = vadd.f32 %v88, %v277
  %v279 = vpop.f32.mrf.mxu0
  %v280 = vadd.f32 %v84, %v279
  %v281 = vpop.f32.mrf.mxu0
  %v282 = vadd.f32 %v88, %v281
  %283 = vmatprep.mubr.bf16.mxu0 0
  %284 = vmatmul.mubr.bf16.gmra.mxu0 %v55
  %v285 = vpop.f32.mrf.mxu0
  %v286 = vadd.f32 %v84, %v285
  %v287 = vpop.f32.mrf.mxu0
  %v288 = vadd.f32 %v88, %v287
  %v289 = vpop.f32.mrf.mxu0
  %v290 = vadd.f32 %v84, %v289
  %v291 = vpop.f32.mrf.mxu0
  %v292 = vadd.f32 %v88, %v291
  %293 = vmatprep.mubr.bf16.mxu0 0
  %294 = vmatmul.mubr.bf16.gmra.mxu0 %v56
  %v295 = vpop.f32.mrf.mxu0
  %v296 = vadd.f32 %v84, %v295
  %v297 = vpop.f32.mrf.mxu0
  %v298 = vadd.f32 %v88, %v297
  %v299 = vpop.f32.mrf.mxu0
  %v300 = vadd.f32 %v84, %v299
  %v301 = vpop.f32.mrf.mxu0
  %v302 = vadd.f32 %v88, %v301
  %303 = vmatprep.mubr.bf16.mxu0 0
  %304 = vmatmul.mubr.bf16.gmra.mxu0 %v57
  %v305 = vpop.f32.mrf.mxu0
  %v306 = vadd.f32 %v84, %v305
  %v307 = vpop.f32.mrf.mxu0
  %v308 = vadd.f32 %v88, %v307
  %v309 = vpop.f32.mrf.mxu0
  %v310 = vadd.f32 %v84, %v309
  %v311 = vpop.f32.mrf.mxu0
  %v312 = vadd.f32 %v88, %v311
  %313 = vmatprep.mubr.bf16.mxu0 0
  %314 = vmatmul.mubr.bf16.gmra.mxu0 %v58
  %v315 = vpop.f32.mrf.mxu0
  %v316 = vadd.f32 %v84, %v315
  %v317 = vpop.f32.mrf.mxu0
  %v318 = vadd.f32 %v88, %v317
  %v319 = vpop.f32.mrf.mxu0
  %v320 = vadd.f32 %v84, %v319
  %v321 = vpop.f32.mrf.mxu0
  %v322 = vadd.f32 %v88, %v321
  %323 = vmatprep.mubr.bf16.mxu0 0
  %324 = vmatmul.mubr.bf16.gmra.mxu0 %v59
  %v325 = vpop.f32.mrf.mxu0
  %v326 = vadd.f32 %v84, %v325
  %v327 = vpop.f32.mrf.mxu0
  %v328 = vadd.f32 %v88, %v327
  %v329 = vpop.f32.mrf.mxu0
  %v330 = vadd.f32 %v84, %v329
  %v331 = vpop.f32.mrf.mxu0
  %v332 = vadd.f32 %v88, %v331
  %333 = vmatprep.mubr.bf16.mxu0 0
  %334 = vmatmul.mubr.bf16.gmra.mxu0 %v60
  %v335 = vpop.f32.mrf.mxu0
  %v336 = vadd.f32 %v84, %v335
  %v337 = vpop.f32.mrf.mxu0
  %v338 = vadd.f32 %v88, %v337
  %v339 = vpop.f32.mrf.mxu0
  %v340 = vadd.f32 %v84, %v339
  %v341 = vpop.f32.mrf.mxu0
  %v342 = vadd.f32 %v88, %v341
  %343 = vmatprep.mubr.bf16.mxu0 0
  %344 = vmatmul.mubr.bf16.gmra.mxu0 %v61
  %v345 = vpop.f32.mrf.mxu0
  %v346 = vadd.f32 %v84, %v345
  %v347 = vpop.f32.mrf.mxu0
  %v348 = vadd.f32 %v88, %v347
  %v349 = vpop.f32.mrf.mxu0
  %v350 = vadd.f32 %v84, %v349
  %v351 = vpop.f32.mrf.mxu0
  %v352 = vadd.f32 %v88, %v351
  %353 = vmatprep.mubr.bf16.mxu0 0
  %354 = vmatmul.mubr.bf16.gmra.mxu0 %v62
  %v355 = vpop.f32.mrf.mxu0
  %v356 = vadd.f32 %v84, %v355
  %v357 = vpop.f32.mrf.mxu0
  %v358 = vadd.f32 %v88, %v357
  %v359 = vpop.f32.mrf.mxu0
  %v360 = vadd.f32 %v84, %v359
  %v361 = vpop.f32.mrf.mxu0
  %v362 = vadd.f32 %v88, %v361
  %363 = vdwg.mxu0
  %v364 = vpack.c.bf16 %v210, %v206
  %v365 = vpack.c.bf16 %v212, %v208
  %v366 = vpack.c.bf16 %v220, %v216
  %v367 = vpack.c.bf16 %v222, %v218
  %v368 = vpack.c.bf16 %v230, %v226
  %v369 = vpack.c.bf16 %v232, %v228
  %v370 = vpack.c.bf16 %v240, %v236
  %v371 = vpack.c.bf16 %v242, %v238
  %v372 = vpack.c.bf16 %v250, %v246
  %v373 = vpack.c.bf16 %v252, %v248
  %v374 = vpack.c.bf16 %v260, %v256
  %v375 = vpack.c.bf16 %v262, %v258
  %v376 = vpack.c.bf16 %v270, %v266
  %v377 = vpack.c.bf16 %v272, %v268
  %v378 = vpack.c.bf16 %v280, %v276
  %v379 = vpack.c.bf16 %v282, %v278
  %v380 = vpack.c.bf16 %v290, %v286
  %v381 = vpack.c.bf16 %v292, %v288
  %v382 = vpack.c.bf16 %v300, %v296
  %v383 = vpack.c.bf16 %v302, %v298
  %v384 = vpack.c.bf16 %v310, %v306
  %v385 = vpack.c.bf16 %v312, %v308
  %v386 = vpack.c.bf16 %v320, %v316
  %v387 = vpack.c.bf16 %v322, %v318
  %v388 = vpack.c.bf16 %v330, %v326
  %v389 = vpack.c.bf16 %v332, %v328
  %v390 = vpack.c.bf16 %v340, %v336
  %v391 = vpack.c.bf16 %v342, %v338
  %v392 = vpack.c.bf16 %v350, %v346
  %v393 = vpack.c.bf16 %v352, %v348
  %v394 = vpack.c.bf16 %v360, %v356
  %v395 = vpack.c.bf16 %v362, %v358
  %v428 = vunpack.c.l.b16 %v364
  %v429 = vunpack.c.l.b16 %v365
  %v430 = vunpack.c.h.b16 %v364
  %v431 = vunpack.c.h.b16 %v365
  %v432 = vunpack.c.l.b16 %v366
  %v433 = vunpack.c.l.b16 %v367
  %v434 = vunpack.c.h.b16 %v366
  %v435 = vunpack.c.h.b16 %v367
  %v436 = vunpack.c.l.b16 %v368
  %v437 = vunpack.c.l.b16 %v369
  %v438 = vunpack.c.h.b16 %v368
  %v439 = vunpack.c.h.b16 %v369
  %v440 = vunpack.c.l.b16 %v370
  %v441 = vunpack.c.l.b16 %v371
  %v442 = vunpack.c.h.b16 %v370
  %v443 = vunpack.c.h.b16 %v371
  %v444 = vunpack.c.l.b16 %v372
  %v445 = vunpack.c.l.b16 %v373
  %v446 = vunpack.c.h.b16 %v372
  %v447 = vunpack.c.h.b16 %v373
  %v448 = vunpack.c.l.b16 %v374
  %v449 = vunpack.c.l.b16 %v375
  %v450 = vunpack.c.h.b16 %v374
  %v451 = vunpack.c.h.b16 %v375
  %v452 = vunpack.c.l.b16 %v376
  %v453 = vunpack.c.l.b16 %v377
  %v454 = vunpack.c.h.b16 %v376
  %v455 = vunpack.c.h.b16 %v377
  %v456 = vunpack.c.l.b16 %v378
  %v457 = vunpack.c.l.b16 %v379
  %v458 = vunpack.c.h.b16 %v378
  %v459 = vunpack.c.h.b16 %v379
  %v460 = vunpack.c.l.b16 %v380
  %v461 = vunpack.c.l.b16 %v381
  %v462 = vunpack.c.h.b16 %v380
  %v463 = vunpack.c.h.b16 %v381
  %v464 = vunpack.c.l.b16 %v382
  %v465 = vunpack.c.l.b16 %v383
  %v466 = vunpack.c.h.b16 %v382
  %v467 = vunpack.c.h.b16 %v383
  %v468 = vunpack.c.l.b16 %v384
  %v469 = vunpack.c.l.b16 %v385
  %v470 = vunpack.c.h.b16 %v384
  %v471 = vunpack.c.h.b16 %v385
  %v472 = vunpack.c.l.b16 %v386
  %v473 = vunpack.c.l.b16 %v387
  %v474 = vunpack.c.h.b16 %v386
  %v475 = vunpack.c.h.b16 %v387
  %v476 = vunpack.c.l.b16 %v388
  %v477 = vunpack.c.l.b16 %v389
  %v478 = vunpack.c.h.b16 %v388
  %v479 = vunpack.c.h.b16 %v389
  %v480 = vunpack.c.l.b16 %v390
  %v481 = vunpack.c.l.b16 %v391
  %v482 = vunpack.c.h.b16 %v390
  %v483 = vunpack.c.h.b16 %v391
  %v484 = vunpack.c.l.b16 %v392
  %v485 = vunpack.c.l.b16 %v393
  %v486 = vunpack.c.h.b16 %v392
  %v487 = vunpack.c.h.b16 %v393
  %v488 = vunpack.c.l.b16 %v394
  %v489 = vunpack.c.l.b16 %v395
  %v490 = vunpack.c.h.b16 %v394
  %v491 = vunpack.c.h.b16 %v395
  %v492 = vpack.c.b16 %v429, %v428
  %v493 = vpack.c.b16 %v431, %v430
  %v494 = vpack.c.b16 %v433, %v432
  %v495 = vpack.c.b16 %v435, %v434
  %v496 = vpack.c.b16 %v437, %v436
  %v497 = vpack.c.b16 %v439, %v438
  %v498 = vpack.c.b16 %v441, %v440
  %v499 = vpack.c.b16 %v443, %v442
  %v500 = vpack.c.b16 %v445, %v444
  %v501 = vpack.c.b16 %v447, %v446
  %v502 = vpack.c.b16 %v449, %v448
  %v503 = vpack.c.b16 %v451, %v450
  %v504 = vpack.c.b16 %v453, %v452
  %v505 = vpack.c.b16 %v455, %v454
  %v506 = vpack.c.b16 %v457, %v456
  %v507 = vpack.c.b16 %v459, %v458
  %v508 = vpack.c.b16 %v461, %v460
  %v509 = vpack.c.b16 %v463, %v462
  %v510 = vpack.c.b16 %v465, %v464
  %v511 = vpack.c.b16 %v467, %v466
  %v512 = vpack.c.b16 %v469, %v468
  %v513 = vpack.c.b16 %v471, %v470
  %v514 = vpack.c.b16 %v473, %v472
  %v515 = vpack.c.b16 %v475, %v474
  %v516 = vpack.c.b16 %v477, %v476
  %v517 = vpack.c.b16 %v479, %v478
  %v518 = vpack.c.b16 %v481, %v480
  %v519 = vpack.c.b16 %v483, %v482
  %v520 = vpack.c.b16 %v485, %v484
  %v521 = vpack.c.b16 %v487, %v486
  %v522 = vpack.c.b16 %v489, %v488
  %v523 = vpack.c.b16 %v491, %v490
  %556 = vst [vmem:[%s3] sm:$0xff] %v492
  %557 = vst [vmem:[%s3 + $0x8] sm:$0xff] %v493
  %558 = vst [vmem:[%s3 + $0x10] sm:$0xff] %v494
  %559 = vst [vmem:[%s3 + $0x18] sm:$0xff] %v495
  %560 = vst [vmem:[%s3 + $0x20] sm:$0xff] %v496
  %561 = vst [vmem:[%s3 + $0x28] sm:$0xff] %v497
  %562 = vst [vmem:[%s3 + $0x30] sm:$0xff] %v498
  %563 = vst [vmem:[%s3 + $0x38] sm:$0xff] %v499
  %564 = vst [vmem:[%s3 + $0x40] sm:$0xff] %v500
  %565 = vst [vmem:[%s3 + $0x48] sm:$0xff] %v501
  %566 = vst [vmem:[%s3 + $0x50] sm:$0xff] %v502
  %567 = vst [vmem:[%s3 + $0x58] sm:$0xff] %v503
  %568 = vst [vmem:[%s3 + $0x60] sm:$0xff] %v504
  %569 = vst [vmem:[%s3 + $0x68] sm:$0xff] %v505
  %570 = vst [vmem:[%s3 + $0x70] sm:$0xff] %v506
  %571 = vst [vmem:[%s3 + $0x78] sm:$0xff] %v507
  %572 = vst [vmem:[%s3 + $0x80] sm:$0xff] %v508
  %573 = vst [vmem:[%s3 + $0x88] sm:$0xff] %v509
  %574 = vst [vmem:[%s3 + $0x90] sm:$0xff] %v510
  %575 = vst [vmem:[%s3 + $0x98] sm:$0xff] %v511
  %576 = vst [vmem:[%s3 + $0xa0] sm:$0xff] %v512
  %577 = vst [vmem:[%s3 + $0xa8] sm:$0xff] %v513
  %578 = vst [vmem:[%s3 + $0xb0] sm:$0xff] %v514
  %579 = vst [vmem:[%s3 + $0xb8] sm:$0xff] %v515
  %580 = vst [vmem:[%s3 + $0xc0] sm:$0xff] %v516
  %581 = vst [vmem:[%s3 + $0xc8] sm:$0xff] %v517
  %582 = vst [vmem:[%s3 + $0xd0] sm:$0xff] %v518
  %583 = vst [vmem:[%s3 + $0xd8] sm:$0xff] %v519
  %584 = vst [vmem:[%s3 + $0xe0] sm:$0xff] %v520
  %585 = vst [vmem:[%s3 + $0xe8] sm:$0xff] %v521
  %586 = vst [vmem:[%s3 + $0xf0] sm:$0xff] %v522
  %587 = vst [vmem:[%s3 + $0xf8] sm:$0xff] %v523
  // Predicated region
  $region14: #{_attention_forward.2} parent=0 // pred_check
    _
  $region15: #{_attention_forward.2} parent=0 // pred_check_branch
    %589 = sbr.rel (0) target = $region17
  $region16: #{_attention_forward.2} parent=0 // pred_region
    _
  $region17: #{_attention_forward.2} parent=0 // pred_fallthru
    _
  // Predicated region
  $region18: #{_attention_forward.2} parent=0 // pred_check
    _
  $region19: #{_attention_forward.2} parent=0 // pred_check_branch
    %591 = sbr.rel (0) target = $region21
  $region20: #{_attention_forward.2} parent=0 // pred_region
    _
  $region21: #{_attention_forward.2} parent=0 // pred_fallthru
    _

// kernel: _attention_forward.3
$region0: #{_attention_forward.3}
  #allocation0 [shape = 'u32[]', space=smem, size = 0x4, offset = 0x4, fixed_abs, tag = 'smem constant byte address 0x4 - core index']
  #allocation1 [shape = 'u32[144,128]{1,0:T(1,128)}', space=vmem, size = 0x12000, scoped, tag = 'internal scratch']
  #allocation2 [shape = 'bf16[64,128]{1,0:T(8,128)(2,1)}', space=vmem, size = 0x4000, scoped, tag = 'scratch operand']
  #allocation3 [shape = 'f32[64,1]{1,0:T(8,128)}', space=vmem, size = 0x8000, scoped, tag = 'scratch operand']
  #allocation4 [shape = 'f32[64,1]{1,0:T(8,128)}', space=vmem, size = 0x8000, scoped, tag = 'scratch operand']
  #allocation5 [shape = 'f32[64,128]{1,0:T(8,128)}', space=vmem, size = 0x8000, scoped, tag = 'scratch operand']
  %s0 = inlined_call_operand.vmem [shape: f32[2,128,128], index: 0, kind: input, shape index: {}]
  %s1 = inlined_call_operand.vmem [shape: bf16[128,128], index: 1, kind: input, shape index: {}]
  %s2 = inlined_call_operand.vmem [shape: f32[1,128], index: 2, kind: input, shape index: {}]
  %s3 = inlined_call_operand.vmem [shape: bf16[2,128,256], index: 3, kind: input, shape index: {}, may-alias: {3,4}]
  %s4 = inlined_call_operand.vmem [shape: bf16[2,128,256], index: 4, kind: input, shape index: {}, may-alias: {3,4}]
  %s5 = inlined_call_operand.vmem [shape: bf16[128,128], index: 5, kind: input, shape index: {}]
  %s6 = inlined_call_operand.vmem [shape: f32[1,128], index: 6, kind: input, shape index: {}]
  %s7 = inlined_call_operand.vmem [shape: f32[1,128], index: 7, kind: input, shape index: {}]
  %s8 = inlined_call_operand.vmem [shape: f32[1,128], index: 8, kind: input, shape index: {}]
  %s9 = inlined_call_operand.hbm [shape: f32[2,128,128], index: 9, kind: output, shape index: {}]
  %s10 = sld [smem:[#allocation0]]
  $region159: #{_attention_forward.3} parent=0
    _
  %s12 = ssub.s32 1, %s10
  %s13 = scalar_select 0, %s12, %s10
  $region1: #{_attention_forward.3} parent=0
    #allocation6 [shape = 'u8[65536]{0}', space=vmem, size = 0x10000, scoped, tag = 'input window, operand 3']
    #allocation7 [shape = 'u8[65536]{0}', space=vmem, size = 0x10000, scoped, tag = 'input window, operand 4']
    #allocation8 [shape = 'u8[65536]{0}', space=vmem, size = 0x10000, scoped, tag = 'output window, operand 0']
    #allocation9 [shape = 's32[2]{0}', space=sflag, size = 0x8, scoped, tag = 'scoped memory for _attention_forward.3']
    %14 = vsyncpa [#allocation9], 0
    %s15 = scalar_lea.sflag [#allocation9], 1
    %16 = vsyncpa %s15, 0
    loop: start=0, step=1, limit=6
    $region2: #{_attention_forward.3} parent=1 // loop_pre_header
      _
    $region3: #{_attention_forward.3} parent=1 // loop_header
      %s18 = sphi 0, %s22
      %p19 = scmp.ge.s32.totalorder %s18, 6
      %s25 = sphi 0, %s44
      %s26 = sphi 0, %s40
      %s27 = sphi 0, %s36
      %s28 = sphi 0, %s25
      %s29 = sphi 0, %s26
      %s30 = sphi 0, %s27
      %s31 = sphi 0, %s28
      %s32 = sphi 0, %s29
      %s33 = sphi 0, %s30
      %s49 = sphi 0, %s51
      %s52 = sphi 0, %s49
      %s53 = sphi 0, %s52
      %s69 = sphi 0, %s53
      %s73 = sphi 0, %s73
      %s75 = sphi 0, %s73
      %s76 = sphi 0, %s75
      %s90 = sphi 0, %s76
      %s94 = sphi 0, %s94
      %s96 = sphi 0, %s94
      %s97 = sphi 0, %s96
      %s111 = sphi 0, %s97
      %s119 = sphi 0, %s121
      %s122 = sphi 0, %s119
      %s123 = sphi 0, %s122
      %s139 = sphi 0, %s123
      %s147 = sphi 0, %s149
      %s150 = sphi 0, %s147
      %s151 = sphi 0, %s150
      %s167 = sphi 0, %s151
      %s171 = sphi 0, %s171
      %s173 = sphi 0, %s171
      %s174 = sphi 0, %s173
      %s188 = sphi 0, %s174
      %s192 = sphi 0, %s192
      %s194 = sphi 0, %s192
      %s195 = sphi 0, %s194
      %s209 = sphi 0, %s195
      %s213 = sphi 0, %s213
      %s215 = sphi 0, %s213
      %s216 = sphi 0, %s215
      %s230 = sphi 0, %s216
      %s234 = sphi 0, %s234
      %s236 = sphi 0, %s234
      %s237 = sphi 0, %s236
      %s251 = sphi 0, %s237
      %s259 = sphi 0, %s261
      %s262 = sphi 0, %s259
      %s263 = sphi 0, %s262
      %s279 = sphi 0, %s263
    $region4: #{_attention_forward.3} parent=1 // loop_header_branch
      %21 = sbr.rel (%p19) target = $region8
    $region5: #{_attention_forward.3} parent=1 // loop_body
      %s23 = ssub.s32 %s18, 1
      %s24 = ssub.s32 %s18, 2
      %s34 = sadd.s32 1, %s27
      %p35 = scmp.ge.s32.totalorder %s34, 1
      %s36 = scalar_select %p35, 0, %s34
      %s37 = sadd.s32 1, %s26
      %s38 = scalar_select %p35, %s37, %s26
      %p39 = scmp.ge.s32.totalorder %s38, 2
      %s40 = scalar_select %p39, 0, %s38
      %s41 = sadd.s32 1, %s25
      %s42 = scalar_select %p39, %s41, %s25
      %p43 = scmp.ge.s32.totalorder %s42, 2
      %s44 = scalar_select %p43, 0, %s42
      %s45 = ssub.s32 %s25, %s44
      %s46 = ssub.s32 %s26, %s40
      %s47 = sor.u32 %s45, %s46
      %p48 = scmp.eq.s32.totalorder %s47, 0
      %s50 = sadd.s32 %s49, 1
      %s51 = scalar_select %p48, %s49, %s50
      %p54 = pneg %p48
      %p55 = scmp.eq.s32.totalorder %s18, 3
      %p56 = por %p54, %p55
      %p57 = scmp.ne.s32.totalorder %s49, %s52
      %p58 = scmp.eq.s32.totalorder %s18, 0
      %p59 = por %p57, %p58
      %p60 = scmp.ne.s32.totalorder %s49, %s52
      %p61 = scmp.eq.s32.totalorder %s23, 3
      %p62 = por %p60, %p61
      %p63 = scmp.ne.s32.totalorder %s52, %s53
      %p64 = scmp.eq.s32.totalorder %s23, 0
      %p65 = por %p63, %p64
      %p66 = scmp.ne.s32.totalorder %s52, %s53
      %p67 = scmp.eq.s32.totalorder %s24, 3
      %p68 = por %p66, %p67
      %p70 = scmp.ne.s32.totalorder %s53, %s69
      %p71 = scmp.eq.s32.totalorder %s24, 0
      %p72 = por %p70, %p71
      %s74 = sadd.s32 %s73, 1
      %p77 = scmp.eq.s32.totalorder %s18, 3
      %p78 = scmp.ne.s32.totalorder %s73, %s75
      %p79 = scmp.eq.s32.totalorder %s18, 0
      %p80 = por %p78, %p79
      %p81 = scmp.ne.s32.totalorder %s73, %s75
      %p82 = scmp.eq.s32.totalorder %s23, 3
      %p83 = por %p81, %p82
      %p84 = scmp.ne.s32.totalorder %s75, %s76
      %p85 = scmp.eq.s32.totalorder %s23, 0
      %p86 = por %p84, %p85
      %p87 = scmp.ne.s32.totalorder %s75, %s76
      %p88 = scmp.eq.s32.totalorder %s24, 3
      %p89 = por %p87, %p88
      %p91 = scmp.ne.s32.totalorder %s76, %s90
      %p92 = scmp.eq.s32.totalorder %s24, 0
      %p93 = por %p91, %p92
      %s95 = sadd.s32 %s94, 1
      %p98 = scmp.eq.s32.totalorder %s18, 3
      %p99 = scmp.ne.s32.totalorder %s94, %s96
      %p100 = scmp.eq.s32.totalorder %s18, 0
      %p101 = por %p99, %p100
      %p102 = scmp.ne.s32.totalorder %s94, %s96
      %p103 = scmp.eq.s32.totalorder %s23, 3
      %p104 = por %p102, %p103
      %p105 = scmp.ne.s32.totalorder %s96, %s97
      %p106 = scmp.eq.s32.totalorder %s23, 0
      %p107 = por %p105, %p106
      %p108 = scmp.ne.s32.totalorder %s96, %s97
      %p109 = scmp.eq.s32.totalorder %s24, 3
      %p110 = por %p108, %p109
      %p112 = scmp.ne.s32.totalorder %s97, %s111
      %p113 = scmp.eq.s32.totalorder %s24, 0
      %p114 = por %p112, %p113
      %s115 = ssub.s32 %s25, %s44
      %s116 = ssub.s32 %s27, %s36
      %s117 = sor.u32 %s115, %s116
      %p118 = scmp.eq.s32.totalorder %s117, 0
      %s120 = sadd.s32 %s119, 1
      %s121 = scalar_select %p118, %s119, %s120
      %p124 = pneg %p118
      %p125 = scmp.eq.s32.totalorder %s18, 3
      %p126 = por %p124, %p125
      %p127 = scmp.ne.s32.totalorder %s119, %s122
      %p128 = scmp.eq.s32.totalorder %s18, 0
      %p129 = por %p127, %p128
      %p130 = scmp.ne.s32.totalorder %s119, %s122
      %p131 = scmp.eq.s32.totalorder %s23, 3
      %p132 = por %p130, %p131
      %p133 = scmp.ne.s32.totalorder %s122, %s123
      %p134 = scmp.eq.s32.totalorder %s23, 0
      %p135 = por %p133, %p134
      %p136 = scmp.ne.s32.totalorder %s122, %s123
      %p137 = scmp.eq.s32.totalorder %s24, 3
      %p138 = por %p136, %p137
      %p140 = scmp.ne.s32.totalorder %s123, %s139
      %p141 = scmp.eq.s32.totalorder %s24, 0
      %p142 = por %p140, %p141
      %s143 = ssub.s32 %s25, %s44
      %s144 = ssub.s32 %s27, %s36
      %s145 = sor.u32 %s143, %s144
      %p146 = scmp.eq.s32.totalorder %s145, 0
      %s148 = sadd.s32 %s147, 1
      %s149 = scalar_select %p146, %s147, %s148
      %p152 = pneg %p146
      %p153 = scmp.eq.s32.totalorder %s18, 3
      %p154 = por %p152, %p153
      %p155 = scmp.ne.s32.totalorder %s147, %s150
      %p156 = scmp.eq.s32.totalorder %s18, 0
      %p157 = por %p155, %p156
      %p158 = scmp.ne.s32.totalorder %s147, %s150
      %p159 = scmp.eq.s32.totalorder %s23, 3
      %p160 = por %p158, %p159
      %p161 = scmp.ne.s32.totalorder %s150, %s151
      %p162 = scmp.eq.s32.totalorder %s23, 0
      %p163 = por %p161, %p162
      %p164 = scmp.ne.s32.totalorder %s150, %s151
      %p165 = scmp.eq.s32.totalorder %s24, 3
      %p166 = por %p164, %p165
      %p168 = scmp.ne.s32.totalorder %s151, %s167
      %p169 = scmp.eq.s32.totalorder %s24, 0
      %p170 = por %p168, %p169
      %s172 = sadd.s32 %s171, 1
      %p175 = scmp.eq.s32.totalorder %s18, 3
      %p176 = scmp.ne.s32.totalorder %s171, %s173
      %p177 = scmp.eq.s32.totalorder %s18, 0
      %p178 = por %p176, %p177
      %p179 = scmp.ne.s32.totalorder %s171, %s173
      %p180 = scmp.eq.s32.totalorder %s23, 3
      %p181 = por %p179, %p180
      %p182 = scmp.ne.s32.totalorder %s173, %s174
      %p183 = scmp.eq.s32.totalorder %s23, 0
      %p184 = por %p182, %p183
      %p185 = scmp.ne.s32.totalorder %s173, %s174
      %p186 = scmp.eq.s32.totalorder %s24, 3
      %p187 = por %p185, %p186
      %p189 = scmp.ne.s32.totalorder %s174, %s188
      %p190 = scmp.eq.s32.totalorder %s24, 0
      %p191 = por %p189, %p190
      %s193 = sadd.s32 %s192, 1
      %p196 = scmp.eq.s32.totalorder %s18, 3
      %p197 = scmp.ne.s32.totalorder %s192, %s194
      %p198 = scmp.eq.s32.totalorder %s18, 0
      %p199 = por %p197, %p198
      %p200 = scmp.ne.s32.totalorder %s192, %s194
      %p201 = scmp.eq.s32.totalorder %s23, 3
      %p202 = por %p200, %p201
      %p203 = scmp.ne.s32.totalorder %s194, %s195
      %p204 = scmp.eq.s32.totalorder %s23, 0
      %p205 = por %p203, %p204
      %p206 = scmp.ne.s32.totalorder %s194, %s195
      %p207 = scmp.eq.s32.totalorder %s24, 3
      %p208 = por %p206, %p207
      %p210 = scmp.ne.s32.totalorder %s195, %s209
      %p211 = scmp.eq.s32.totalorder %s24, 0
      %p212 = por %p210, %p211
      %s214 = sadd.s32 %s213, 1
      %p217 = scmp.eq.s32.totalorder %s18, 3
      %p218 = scmp.ne.s32.totalorder %s213, %s215
      %p219 = scmp.eq.s32.totalorder %s18, 0
      %p220 = por %p218, %p219
      %p221 = scmp.ne.s32.totalorder %s213, %s215
      %p222 = scmp.eq.s32.totalorder %s23, 3
      %p223 = por %p221, %p222
      %p224 = scmp.ne.s32.totalorder %s215, %s216
      %p225 = scmp.eq.s32.totalorder %s23, 0
      %p226 = por %p224, %p225
      %p227 = scmp.ne.s32.totalorder %s215, %s216
      %p228 = scmp.eq.s32.totalorder %s24, 3
      %p229 = por %p227, %p228
      %p231 = scmp.ne.s32.totalorder %s216, %s230
      %p232 = scmp.eq.s32.totalorder %s24, 0
      %p233 = por %p231, %p232
      %s235 = sadd.s32 %s234, 1
      %p238 = scmp.eq.s32.totalorder %s18, 3
      %p239 = scmp.ne.s32.totalorder %s234, %s236
      %p240 = scmp.eq.s32.totalorder %s18, 0
      %p241 = por %p239, %p240
      %p242 = scmp.ne.s32.totalorder %s234, %s236
      %p243 = scmp.eq.s32.totalorder %s23, 3
      %p244 = por %p242, %p243
      %p245 = scmp.ne.s32.totalorder %s236, %s237
      %p246 = scmp.eq.s32.totalorder %s23, 0
      %p247 = por %p245, %p246
      %p248 = scmp.ne.s32.totalorder %s236, %s237
      %p249 = scmp.eq.s32.totalorder %s24, 3
      %p250 = por %p248, %p249
      %p252 = scmp.ne.s32.totalorder %s237, %s251
      %p253 = scmp.eq.s32.totalorder %s24, 0
      %p254 = por %p252, %p253
      %s255 = ssub.s32 %s25, %s44
      %s256 = ssub.s32 %s26, %s40
      %s257 = sor.u32 %s255, %s256
      %p258 = scmp.eq.s32.totalorder %s257, 0
      %s260 = sadd.s32 %s259, 1
      %s261 = scalar_select %p258, %s259, %s260
      %p264 = pneg %p258
      %p265 = scmp.eq.s32.totalorder %s18, 3
      %p266 = por %p264, %p265
      %p267 = scmp.ne.s32.totalorder %s259, %s262
      %p268 = scmp.eq.s32.totalorder %s18, 0
      %p269 = por %p267, %p268
      %p270 = scmp.ne.s32.totalorder %s259, %s262
      %p271 = scmp.eq.s32.totalorder %s23, 3
      %p272 = por %p270, %p271
      %p273 = scmp.ne.s32.totalorder %s262, %s263
      %p274 = scmp.eq.s32.totalorder %s23, 0
      %p275 = por %p273, %p274
      %p276 = scmp.ne.s32.totalorder %s262, %s263
      %p277 = scmp.eq.s32.totalorder %s24, 3
      %p278 = por %p276, %p277
      %p280 = scmp.ne.s32.totalorder %s263, %s279
      %p281 = scmp.eq.s32.totalorder %s24, 0
      %p282 = por %p280, %p281
      %p283 = scmp.le.s32.totalorder 1, %s18
      %p284 = scmp.lt.s32.totalorder %s18, 5
      %p285 = pnand %p283, %p284
      %p286 = pneg %p285
      // Predicated region
      $region9: #{_attention_forward.3} parent=5 // pred_check
        _
      $region10: #{_attention_forward.3} parent=5 // pred_check_branch
        %288 = sbr.rel (%p285) target = $region12
      $region11: #{_attention_forward.3} parent=5 // pred_region
        %s289 = ssub.s32 %s18, 1
        // Predicated region
        $region13: #{_attention_forward.3} parent=11 // pred_check
          %p290 = pneg %p86
        $region14: #{_attention_forward.3} parent=11 // pred_check_branch
          %292 = sbr.rel (%p290) target = $region16
        $region15: #{_attention_forward.3} parent=11 // pred_region
          _
        $region16: #{_attention_forward.3} parent=11 // pred_fallthru
          _
        // Predicated region
        $region17: #{_attention_forward.3} parent=11 // pred_check
          %p293 = pneg %p107
        $region18: #{_attention_forward.3} parent=11 // pred_check_branch
          %295 = sbr.rel (%p293) target = $region20
        $region19: #{_attention_forward.3} parent=11 // pred_region
          _
        $region20: #{_attention_forward.3} parent=11 // pred_fallthru
          _
        // Predicated region
        $region21: #{_attention_forward.3} parent=11 // pred_check
          %p296 = pneg %p184
        $region22: #{_attention_forward.3} parent=11 // pred_check_branch
          %298 = sbr.rel (%p296) target = $region24
        $region23: #{_attention_forward.3} parent=11 // pred_region
          _
        $region24: #{_attention_forward.3} parent=11 // pred_fallthru
          _
        // Predicated region
        $region25: #{_attention_forward.3} parent=11 // pred_check
          %p299 = pneg %p205
        $region26: #{_attention_forward.3} parent=11 // pred_check_branch
          %301 = sbr.rel (%p299) target = $region28
        $region27: #{_attention_forward.3} parent=11 // pred_region
          _
        $region28: #{_attention_forward.3} parent=11 // pred_fallthru
          _
        // Predicated region
        $region29: #{_attention_forward.3} parent=11 // pred_check
          %p302 = pneg %p226
        $region30: #{_attention_forward.3} parent=11 // pred_check_branch
          %304 = sbr.rel (%p302) target = $region32
        $region31: #{_attention_forward.3} parent=11 // pred_region
          _
        $region32: #{_attention_forward.3} parent=11 // pred_fallthru
          _
        // Predicated region
        $region33: #{_attention_forward.3} parent=11 // pred_check
          %p305 = pneg %p247
        $region34: #{_attention_forward.3} parent=11 // pred_check_branch
          %307 = sbr.rel (%p305) target = $region36
        $region35: #{_attention_forward.3} parent=11 // pred_region
          _
        $region36: #{_attention_forward.3} parent=11 // pred_fallthru
          _
      $region12: #{_attention_forward.3} parent=5 // pred_fallthru
        _
      %p308 = scmp.lt.s32.totalorder %s18, 4
      // Predicated region
      $region37: #{_attention_forward.3} parent=5 // pred_check
        %p309 = pneg %p308
      $region38: #{_attention_forward.3} parent=5 // pred_check_branch
        %311 = sbr.rel (%p309) target = $region40
      $region39: #{_attention_forward.3} parent=5 // pred_region
        // Predicated region
        $region41: #{_attention_forward.3} parent=39 // pred_check
          %p312 = pneg %p59
        $region42: #{_attention_forward.3} parent=39 // pred_check_branch
          %314 = sbr.rel (%p312) target = $region44
        $region43: #{_attention_forward.3} parent=39 // pred_region
          %s315 = smul.u32 8, %s26
          %p316 = scmp.lt.s32.totalorder %s25, 1
          %s317 = scalar_select %p316, %s25, 1
          %p318 = scmp.lt.s32.totalorder %s315, 15
          %s319 = scalar_select %p318, %s315, 15
          %s320 = smul.addr %s317, 16
          %s321 = sadd.s32 %s319, %s320
          %s322 = smul.addr %s321, 8
          %s323 = scalar_lea.vmem %s0, %s322
          %s324 = smul.u32 8, %s26
        $region44: #{_attention_forward.3} parent=39 // pred_fallthru
          _
        // Predicated region
        $region45: #{_attention_forward.3} parent=39 // pred_check
          %p325 = pneg %p129
        $region46: #{_attention_forward.3} parent=39 // pred_check_branch
          %327 = sbr.rel (%p325) target = $region48
        $region47: #{_attention_forward.3} parent=39 // pred_region
          %s328 = sand.u32 %s119, 1
          %s329 = sand.u32 %s119, 1
          %s330 = smul.addr %s329, 64
          %s331 = scalar_lea.vmem [#allocation6], %s330
          %s332 = smul.u32 16, %s27
          %s333 = smul.addr %s332, 2
          %s334 = smul.addr %s25, 32
          %s335 = sadd.s32 %s333, %s334
          %s336 = smul.addr %s335, 4
          %s337 = scalar_lea.vmem %s3, %s336
          // Predicated region
          $region49: #{_attention_forward.3} parent=47 // pred_check
            _
          $region50: #{_attention_forward.3} parent=47 // pred_check_branch
            %339 = sbr.rel (0) target = $region52
          $region51: #{_attention_forward.3} parent=47 // pred_region
            // Predicated region
            $region53: #{_attention_forward.3} parent=51 // pred_check
              _
            $region54: #{_attention_forward.3} parent=51 // pred_check_branch
              %341 = sbr.rel target = $region56
            $region55: #{_attention_forward.3} parent=51 // pred_region
              // Predicated region
              $region68: #{_attention_forward.3} parent=55 // pred_check
                _
              $region69: #{_attention_forward.3} parent=55 // pred_check_branch
                %387 = sbr.rel (0) target = $region71
              $region70: #{_attention_forward.3} parent=55 // pred_region
                loop: start=0, step=1, limit=1
                $region72: #{_attention_forward.3} parent=70 // loop_pre_header
                  _
                $region73: #{_attention_forward.3} parent=70 // loop_header
                  %s389 = sphi 0, %s393
                  %p390 = scmp.ge.s32.totalorder %s389, 1
                  %s394 = sphi %s337, %s337
                  %s395 = sphi %s331, %s331
                $region74: #{_attention_forward.3} parent=70 // loop_header_branch
                  %392 = sbr.rel (%p390) target = $region78
                $region75: #{_attention_forward.3} parent=70 // loop_body
                  _
                $region76: #{_attention_forward.3} parent=70 // loop_footer
                  %s393 = sadd.s32 1, %s389
                $region77: #{_attention_forward.3} parent=70 // loop_footer_branch
                  %388 = sbr.rel target = $region73
                $region78: #{_attention_forward.3} parent=70 // loop_exit
                  _
                %s397 = ssub.s32 16, 1
                loop: start=0, step=1, limit=1
                $region79: #{_attention_forward.3} parent=70 // loop_pre_header
                  _
                $region80: #{_attention_forward.3} parent=70 // loop_header
                  %s399 = sphi 0, %s403
                  %p400 = scmp.ge.s32.totalorder %s399, 1
                  %s404 = sphi %s337, %s337
                  %s405 = sphi %s331, %s331
                $region81: #{_attention_forward.3} parent=70 // loop_header_branch
                  %402 = sbr.rel (%p400) target = $region85
                $region82: #{_attention_forward.3} parent=70 // loop_body
                  %v406 = vld [vmem:[%s404] sm:%s397]
                  %407 = vst [vmem:[%s405] sm:%s397] %v406
                  %v408 = vld [vmem:[%s404 + $0x8] sm:%s397]
                  %409 = vst [vmem:[%s405 + $0x4] sm:%s397] %v408
                  %v410 = vld [vmem:[%s404 + $0x10] sm:%s397]
                  %411 = vst [vmem:[%s405 + $0x8] sm:%s397] %v410
                  %v412 = vld [vmem:[%s404 + $0x18] sm:%s397]
                  %413 = vst [vmem:[%s405 + $0xc] sm:%s397] %v412
                  %v414 = vld [vmem:[%s404 + $0x20] sm:%s397]
                  %415 = vst [vmem:[%s405 + $0x10] sm:%s397] %v414
                  %v416 = vld [vmem:[%s404 + $0x28] sm:%s397]
                  %417 = vst [vmem:[%s405 + $0x14] sm:%s397] %v416
                  %v418 = vld [vmem:[%s404 + $0x30] sm:%s397]
                  %419 = vst [vmem:[%s405 + $0x18] sm:%s397] %v418
                  %v420 = vld [vmem:[%s404 + $0x38] sm:%s397]
                  %421 = vst [vmem:[%s405 + $0x1c] sm:%s397] %v420
                  %v422 = vld [vmem:[%s404 + $0x40] sm:%s397]
                  %423 = vst [vmem:[%s405 + $0x20] sm:%s397] %v422
                  %v424 = vld [vmem:[%s404 + $0x48] sm:%s397]
                  %425 = vst [vmem:[%s405 + $0x24] sm:%s397] %v424
                  %v426 = vld [vmem:[%s404 + $0x50] sm:%s397]
                  %427 = vst [vmem:[%s405 + $0x28] sm:%s397] %v426
                  %v428 = vld [vmem:[%s404 + $0x58] sm:%s397]
                  %429 = vst [vmem:[%s405 + $0x2c] sm:%s397] %v428
                  %v430 = vld [vmem:[%s404 + $0x60] sm:%s397]
                  %431 = vst [vmem:[%s405 + $0x30] sm:%s397] %v430
                  %v432 = vld [vmem:[%s404 + $0x68] sm:%s397]
                  %433 = vst [vmem:[%s405 + $0x34] sm:%s397] %v432
                  %v434 = vld [vmem:[%s404 + $0x70] sm:%s397]
                  %435 = vst [vmem:[%s405 + $0x38] sm:%s397] %v434
                  %v436 = vld [vmem:[%s404 + $0x78] sm:%s397]
                  %437 = vst [vmem:[%s405 + $0x3c] sm:%s397] %v436
                $region83: #{_attention_forward.3} parent=70 // loop_footer
                  %s403 = sadd.s32 1, %s399
                $region84: #{_attention_forward.3} parent=70 // loop_footer_branch
                  %398 = sbr.rel target = $region80
                $region85: #{_attention_forward.3} parent=70 // loop_exit
                  _
              $region71: #{_attention_forward.3} parent=55 // pred_fallthru
                _
            $region56: #{_attention_forward.3} parent=51 // pred_fallthru
              _
            // Predicated region
            $region57: #{_attention_forward.3} parent=51 // pred_check
              _
            $region58: #{_attention_forward.3} parent=51 // pred_check_branch
              %343 = sbr.rel (0) target = $region60
            $region59: #{_attention_forward.3} parent=51 // pred_region
              %s345 = ssub.s32 16, 1
              loop: start=0, step=1, limit=1
              $region61: #{_attention_forward.3} parent=59 // loop_pre_header
                _
              $region62: #{_attention_forward.3} parent=59 // loop_header
                %s347 = sphi 0, %s351
                %p348 = scmp.ge.s32.totalorder %s347, 1
                %s352 = sphi %s337, %s337
                %s353 = sphi %s331, %s331
              $region63: #{_attention_forward.3} parent=59 // loop_header_branch
                %350 = sbr.rel (%p348) target = $region67
              $region64: #{_attention_forward.3} parent=59 // loop_body
                %v354 = vld [vmem:[%s352] sm:%s345]
                %355 = vst [vmem:[%s353] sm:%s345] %v354
                %v356 = vld [vmem:[%s352 + $0x8] sm:%s345]
                %357 = vst [vmem:[%s353 + $0x4] sm:%s345] %v356
                %v358 = vld [vmem:[%s352 + $0x10] sm:%s345]
                %359 = vst [vmem:[%s353 + $0x8] sm:%s345] %v358
                %v360 = vld [vmem:[%s352 + $0x18] sm:%s345]
                %361 = vst [vmem:[%s353 + $0xc] sm:%s345] %v360
                %v362 = vld [vmem:[%s352 + $0x20] sm:%s345]
                %363 = vst [vmem:[%s353 + $0x10] sm:%s345] %v362
                %v364 = vld [vmem:[%s352 + $0x28] sm:%s345]
                %365 = vst [vmem:[%s353 + $0x14] sm:%s345] %v364
                %v366 = vld [vmem:[%s352 + $0x30] sm:%s345]
                %367 = vst [vmem:[%s353 + $0x18] sm:%s345] %v366
                %v368 = vld [vmem:[%s352 + $0x38] sm:%s345]
                %369 = vst [vmem:[%s353 + $0x1c] sm:%s345] %v368
                %v370 = vld [vmem:[%s352 + $0x40] sm:%s345]
                %371 = vst [vmem:[%s353 + $0x20] sm:%s345] %v370
                %v372 = vld [vmem:[%s352 + $0x48] sm:%s345]
                %373 = vst [vmem:[%s353 + $0x24] sm:%s345] %v372
                %v374 = vld [vmem:[%s352 + $0x50] sm:%s345]
                %375 = vst [vmem:[%s353 + $0x28] sm:%s345] %v374
                %v376 = vld [vmem:[%s352 + $0x58] sm:%s345]
                %377 = vst [vmem:[%s353 + $0x2c] sm:%s345] %v376
                %v378 = vld [vmem:[%s352 + $0x60] sm:%s345]
                %379 = vst [vmem:[%s353 + $0x30] sm:%s345] %v378
                %v380 = vld [vmem:[%s352 + $0x68] sm:%s345]
                %381 = vst [vmem:[%s353 + $0x34] sm:%s345] %v380
                %v382 = vld [vmem:[%s352 + $0x70] sm:%s345]
                %383 = vst [vmem:[%s353 + $0x38] sm:%s345] %v382
                %v384 = vld [vmem:[%s352 + $0x78] sm:%s345]
                %385 = vst [vmem:[%s353 + $0x3c] sm:%s345] %v384
              $region65: #{_attention_forward.3} parent=59 // loop_footer
                %s351 = sadd.s32 1, %s347
              $region66: #{_attention_forward.3} parent=59 // loop_footer_branch
                %346 = sbr.rel target = $region62
              $region67: #{_attention_forward.3} parent=59 // loop_exit
                _
            $region60: #{_attention_forward.3} parent=51 // pred_fallthru
              _
          $region52: #{_attention_forward.3} parent=47 // pred_fallthru
            _
          %438 = vnop
        $region48: #{_attention_forward.3} parent=39 // pred_fallthru
          _
        // Predicated region
        $region86: #{_attention_forward.3} parent=39 // pred_check
          %p439 = pneg %p157
        $region87: #{_attention_forward.3} parent=39 // pred_check_branch
          %441 = sbr.rel (%p439) target = $region89
        $region88: #{_attention_forward.3} parent=39 // pred_region
          %s442 = sand.u32 %s147, 1
          %s443 = sand.u32 %s147, 1
          %s444 = smul.addr %s443, 64
          %s445 = scalar_lea.vmem [#allocation7], %s444
          %s446 = smul.u32 16, %s27
          %s447 = smul.addr %s446, 2
          %s448 = sadd.s32 1, %s447
          %s449 = smul.addr %s25, 32
          %s450 = sadd.s32 %s448, %s449
          %s451 = smul.addr %s450, 4
          %s452 = scalar_lea.vmem %s4, %s451
          // Predicated region
          $region90: #{_attention_forward.3} parent=88 // pred_check
            _
          $region91: #{_attention_forward.3} parent=88 // pred_check_branch
            %454 = sbr.rel (0) target = $region93
          $region92: #{_attention_forward.3} parent=88 // pred_region
            // Predicated region
            $region94: #{_attention_forward.3} parent=92 // pred_check
              _
            $region95: #{_attention_forward.3} parent=92 // pred_check_branch
              %456 = sbr.rel target = $region97
            $region96: #{_attention_forward.3} parent=92 // pred_region
              // Predicated region
              $region109: #{_attention_forward.3} parent=96 // pred_check
                _
              $region110: #{_attention_forward.3} parent=96 // pred_check_branch
                %502 = sbr.rel (0) target = $region112
              $region111: #{_attention_forward.3} parent=96 // pred_region
                loop: start=0, step=1, limit=1
                $region113: #{_attention_forward.3} parent=111 // loop_pre_header
                  _
                $region114: #{_attention_forward.3} parent=111 // loop_header
                  %s504 = sphi 0, %s508
                  %p505 = scmp.ge.s32.totalorder %s504, 1
                  %s509 = sphi %s452, %s452
                  %s510 = sphi %s445, %s445
                $region115: #{_attention_forward.3} parent=111 // loop_header_branch
                  %507 = sbr.rel (%p505) target = $region119
                $region116: #{_attention_forward.3} parent=111 // loop_body
                  _
                $region117: #{_attention_forward.3} parent=111 // loop_footer
                  %s508 = sadd.s32 1, %s504
                $region118: #{_attention_forward.3} parent=111 // loop_footer_branch
                  %503 = sbr.rel target = $region114
                $region119: #{_attention_forward.3} parent=111 // loop_exit
                  _
                %s512 = ssub.s32 16, 1
                loop: start=0, step=1, limit=1
                $region120: #{_attention_forward.3} parent=111 // loop_pre_header
                  _
                $region121: #{_attention_forward.3} parent=111 // loop_header
                  %s514 = sphi 0, %s518
                  %p515 = scmp.ge.s32.totalorder %s514, 1
                  %s519 = sphi %s452, %s452
                  %s520 = sphi %s445, %s445
                $region122: #{_attention_forward.3} parent=111 // loop_header_branch
                  %517 = sbr.rel (%p515) target = $region126
                $region123: #{_attention_forward.3} parent=111 // loop_body
                  %v521 = vld [vmem:[%s519] sm:%s512]
                  %522 = vst [vmem:[%s520] sm:%s512] %v521
                  %v523 = vld [vmem:[%s519 + $0x8] sm:%s512]
                  %524 = vst [vmem:[%s520 + $0x4] sm:%s512] %v523
                  %v525 = vld [vmem:[%s519 + $0x10] sm:%s512]
                  %526 = vst [vmem:[%s520 + $0x8] sm:%s512] %v525
                  %v527 = vld [vmem:[%s519 + $0x18] sm:%s512]
                  %528 = vst [vmem:[%s520 + $0xc] sm:%s512] %v527
                  %v529 = vld [vmem:[%s519 + $0x20] sm:%s512]
                  %530 = vst [vmem:[%s520 + $0x10] sm:%s512] %v529
                  %v531 = vld [vmem:[%s519 + $0x28] sm:%s512]
                  %532 = vst [vmem:[%s520 + $0x14] sm:%s512] %v531
                  %v533 = vld [vmem:[%s519 + $0x30] sm:%s512]
                  %534 = vst [vmem:[%s520 + $0x18] sm:%s512] %v533
                  %v535 = vld [vmem:[%s519 + $0x38] sm:%s512]
                  %536 = vst [vmem:[%s520 + $0x1c] sm:%s512] %v535
                  %v537 = vld [vmem:[%s519 + $0x40] sm:%s512]
                  %538 = vst [vmem:[%s520 + $0x20] sm:%s512] %v537
                  %v539 = vld [vmem:[%s519 + $0x48] sm:%s512]
                  %540 = vst [vmem:[%s520 + $0x24] sm:%s512] %v539
                  %v541 = vld [vmem:[%s519 + $0x50] sm:%s512]
                  %542 = vst [vmem:[%s520 + $0x28] sm:%s512] %v541
                  %v543 = vld [vmem:[%s519 + $0x58] sm:%s512]
                  %544 = vst [vmem:[%s520 + $0x2c] sm:%s512] %v543
                  %v545 = vld [vmem:[%s519 + $0x60] sm:%s512]
                  %546 = vst [vmem:[%s520 + $0x30] sm:%s512] %v545
                  %v547 = vld [vmem:[%s519 + $0x68] sm:%s512]
                  %548 = vst [vmem:[%s520 + $0x34] sm:%s512] %v547
                  %v549 = vld [vmem:[%s519 + $0x70] sm:%s512]
                  %550 = vst [vmem:[%s520 + $0x38] sm:%s512] %v549
                  %v551 = vld [vmem:[%s519 + $0x78] sm:%s512]
                  %552 = vst [vmem:[%s520 + $0x3c] sm:%s512] %v551
                $region124: #{_attention_forward.3} parent=111 // loop_footer
                  %s518 = sadd.s32 1, %s514
                $region125: #{_attention_forward.3} parent=111 // loop_footer_branch
                  %513 = sbr.rel target = $region121
                $region126: #{_attention_forward.3} parent=111 // loop_exit
                  _
              $region112: #{_attention_forward.3} parent=96 // pred_fallthru
                _
            $region97: #{_attention_forward.3} parent=92 // pred_fallthru
              _
            // Predicated region
            $region98: #{_attention_forward.3} parent=92 // pred_check
              _
            $region99: #{_attention_forward.3} parent=92 // pred_check_branch
              %458 = sbr.rel (0) target = $region101
            $region100: #{_attention_forward.3} parent=92 // pred_region
              %s460 = ssub.s32 16, 1
              loop: start=0, step=1, limit=1
              $region102: #{_attention_forward.3} parent=100 // loop_pre_header
                _
              $region103: #{_attention_forward.3} parent=100 // loop_header
                %s462 = sphi 0, %s466
                %p463 = scmp.ge.s32.totalorder %s462, 1
                %s467 = sphi %s452, %s452
                %s468 = sphi %s445, %s445
              $region104: #{_attention_forward.3} parent=100 // loop_header_branch
                %465 = sbr.rel (%p463) target = $region108
              $region105: #{_attention_forward.3} parent=100 // loop_body
                %v469 = vld [vmem:[%s467] sm:%s460]
                %470 = vst [vmem:[%s468] sm:%s460] %v469
                %v471 = vld [vmem:[%s467 + $0x8] sm:%s460]
                %472 = vst [vmem:[%s468 + $0x4] sm:%s460] %v471
                %v473 = vld [vmem:[%s467 + $0x10] sm:%s460]
                %474 = vst [vmem:[%s468 + $0x8] sm:%s460] %v473
                %v475 = vld [vmem:[%s467 + $0x18] sm:%s460]
                %476 = vst [vmem:[%s468 + $0xc] sm:%s460] %v475
                %v477 = vld [vmem:[%s467 + $0x20] sm:%s460]
                %478 = vst [vmem:[%s468 + $0x10] sm:%s460] %v477
                %v479 = vld [vmem:[%s467 + $0x28] sm:%s460]
                %480 = vst [vmem:[%s468 + $0x14] sm:%s460] %v479
                %v481 = vld [vmem:[%s467 + $0x30] sm:%s460]
                %482 = vst [vmem:[%s468 + $0x18] sm:%s460] %v481
                %v483 = vld [vmem:[%s467 + $0x38] sm:%s460]
                %484 = vst [vmem:[%s468 + $0x1c] sm:%s460] %v483
                %v485 = vld [vmem:[%s467 + $0x40] sm:%s460]
                %486 = vst [vmem:[%s468 + $0x20] sm:%s460] %v485
                %v487 = vld [vmem:[%s467 + $0x48] sm:%s460]
                %488 = vst [vmem:[%s468 + $0x24] sm:%s460] %v487
                %v489 = vld [vmem:[%s467 + $0x50] sm:%s460]
                %490 = vst [vmem:[%s468 + $0x28] sm:%s460] %v489
                %v491 = vld [vmem:[%s467 + $0x58] sm:%s460]
                %492 = vst [vmem:[%s468 + $0x2c] sm:%s460] %v491
                %v493 = vld [vmem:[%s467 + $0x60] sm:%s460]
                %494 = vst [vmem:[%s468 + $0x30] sm:%s460] %v493
                %v495 = vld [vmem:[%s467 + $0x68] sm:%s460]
                %496 = vst [vmem:[%s468 + $0x34] sm:%s460] %v495
                %v497 = vld [vmem:[%s467 + $0x70] sm:%s460]
                %498 = vst [vmem:[%s468 + $0x38] sm:%s460] %v497
                %v499 = vld [vmem:[%s467 + $0x78] sm:%s460]
                %500 = vst [vmem:[%s468 + $0x3c] sm:%s460] %v499
              $region106: #{_attention_forward.3} parent=100 // loop_footer
                %s466 = sadd.s32 1, %s462
              $region107: #{_attention_forward.3} parent=100 // loop_footer_branch
                %461 = sbr.rel target = $region103
              $region108: #{_attention_forward.3} parent=100 // loop_exit
                _
            $region101: #{_attention_forward.3} parent=92 // pred_fallthru
              _
          $region93: #{_attention_forward.3} parent=88 // pred_fallthru
            _
          %553 = vnop
        $region89: #{_attention_forward.3} parent=39 // pred_fallthru
          _
      $region40: #{_attention_forward.3} parent=5 // pred_fallthru
        _
      %p554 = scmp.le.s32.totalorder 1, %s18
      %p555 = scmp.lt.s32.totalorder %s18, 5
      %p556 = pnand %p554, %p555
      %p557 = pneg %p556
      // Predicated region
      $region127: #{_attention_forward.3} parent=5 // pred_check
        _
      $region128: #{_attention_forward.3} parent=5 // pred_check_branch
        %559 = sbr.rel (%p556) target = $region130
      $region129: #{_attention_forward.3} parent=5 // pred_region
        %s560 = ssub.s32 %s18, 1
        %s561 = sand.u32 %s122, 1
        %s562 = sand.u32 %s122, 1
        %s563 = smul.addr %s562, 64
        %s564 = scalar_lea.vmem [#allocation6], %s563
        // Predicated region
        $region131: #{_attention_forward.3} parent=129 // pred_check
          %p565 = pneg %p135
        $region132: #{_attention_forward.3} parent=129 // pred_check_branch
          %567 = sbr.rel (%p565) target = $region134
        $region133: #{_attention_forward.3} parent=129 // pred_region
          _
        $region134: #{_attention_forward.3} parent=129 // pred_fallthru
          _
        %s568 = sand.u32 %s150, 1
        %s569 = sand.u32 %s150, 1
        %s570 = smul.addr %s569, 64
        %s571 = scalar_lea.vmem [#allocation7], %s570
        // Predicated region
        $region135: #{_attention_forward.3} parent=129 // pred_check
          %p572 = pneg %p163
        $region136: #{_attention_forward.3} parent=129 // pred_check_branch
          %574 = sbr.rel (%p572) target = $region138
        $region137: #{_attention_forward.3} parent=129 // pred_region
          _
        $region138: #{_attention_forward.3} parent=129 // pred_fallthru
          _
        %s575 = smul.u32 8, %s29
        %p576 = scmp.lt.s32.totalorder %s28, 1
        %s577 = scalar_select %p576, %s28, 1
        %p578 = scmp.lt.s32.totalorder %s575, 15
        %s579 = scalar_select %p578, %s575, 15
        %s580 = smul.addr %s577, 16
        %s581 = sadd.s32 %s579, %s580
        %s582 = smul.addr %s581, 8
        %s583 = scalar_lea.vmem %s0, %s582
        %p584 = pneg %p65
        %p585 = pneg %p62
        %p586 = pneg %p86
        %p587 = pneg %p83
        %p588 = pneg %p107
        %p589 = pneg %p104
        %s590 = sand.u32 %s122, 1
        %s591 = sand.u32 %s122, 1
        %s592 = smul.addr %s591, 64
        %s593 = scalar_lea.vmem [#allocation6], %s592
        %p594 = pneg %p135
        %p595 = pneg %p132
        %s596 = sand.u32 %s150, 1
        %s597 = sand.u32 %s150, 1
        %s598 = smul.addr %s597, 64
        %s599 = scalar_lea.vmem [#allocation7], %s598
        %p600 = pneg %p163
        %p601 = pneg %p160
        %p602 = pneg %p184
        %p603 = pneg %p181
        %p604 = pneg %p205
        %p605 = pneg %p202
        %p606 = pneg %p226
        %p607 = pneg %p223
        %p608 = pneg %p247
        %p609 = pneg %p244
        %p610 = pneg %p275
        %p611 = pneg %p272
        %s612 = sand.u32 %s262, 1
        %s613 = scalar_lea.sflag [#allocation9], %s612
        %s614 = sand.u32 %s262, 1
        %s615 = smul.addr %s614, 64
        %s616 = scalar_lea.vmem [#allocation8], %s615
        %s617 = smul.u32 8, %s29
        %p618 = scmp.lt.s32.totalorder %s28, 1
        %s619 = scalar_select %p618, %s28, 1
        %p620 = scmp.lt.s32.totalorder %s617, 15
        %s621 = scalar_select %p620, %s617, 15
        %s622 = smul.addr %s619, 16
        %s623 = sadd.s32 %s621, %s622
        %s624 = smul.addr %s623, 8
        %s625 = scalar_lea.vmem %s0, %s624
        %s626 = smul.u32 8, %s29
        %s627 = smul.u32 16, %s30
        %s628 = smul.u32 16, %s30
        %s629 = smul.u32 8, %s29
        %p631 = scmp.eq.s32.totalorder %s30, 0
        // Predicated region
        $region139: #{_attention_forward.3} parent=129 // pred_check
          %p632 = pneg %p631
        $region140: #{_attention_forward.3} parent=129 // pred_check_branch
          %634 = sbr.rel (%p632) target = $region142
        $region141: #{_attention_forward.3} parent=129 // pred_region
          %v635 = vld [vmem:[%s625] sm:$0xff]
          %v636 = vld [vmem:[%s625 + $0x8] sm:$0xff]
          %v637 = vld [vmem:[%s625 + $0x10] sm:$0xff]
          %v638 = vld [vmem:[%s625 + $0x18] sm:$0xff]
          %v639 = vld [vmem:[%s625 + $0x20] sm:$0xff]
          %v640 = vld [vmem:[%s625 + $0x28] sm:$0xff]
          %v641 = vld [vmem:[%s625 + $0x30] sm:$0xff]
          %v642 = vld [vmem:[%s625 + $0x38] sm:$0xff]
          %v643 = vpack.c.bf16 %v636, %v635
          %v644 = vpack.c.bf16 %v638, %v637
          %v645 = vpack.c.bf16 %v640, %v639
          %v646 = vpack.c.bf16 %v642, %v641
          %v647 = vld [vmem:[%s1] sm:$0xf]
          %v648 = vld [vmem:[%s1 + $0x4] sm:$0xf]
          %v649 = vld [vmem:[%s1 + $0x8] sm:$0xf]
          %v650 = vld [vmem:[%s1 + $0xc] sm:$0xf]
          %v651 = vld [vmem:[%s1 + $0x10] sm:$0xf]
          %v652 = vld [vmem:[%s1 + $0x14] sm:$0xf]
          %v653 = vld [vmem:[%s1 + $0x18] sm:$0xf]
          %v654 = vld [vmem:[%s1 + $0x1c] sm:$0xf]
          %v655 = vld [vmem:[%s1 + $0x20] sm:$0xf]
          %v656 = vld [vmem:[%s1 + $0x24] sm:$0xf]
          %v657 = vld [vmem:[%s1 + $0x28] sm:$0xf]
          %v658 = vld [vmem:[%s1 + $0x2c] sm:$0xf]
          %v659 = vld [vmem:[%s1 + $0x30] sm:$0xf]
          %v660 = vld [vmem:[%s1 + $0x34] sm:$0xf]
          %v661 = vld [vmem:[%s1 + $0x38] sm:$0xf]
          %v662 = vld [vmem:[%s1 + $0x3c] sm:$0xf]
          %v663 = vld [vmem:[%s2] sm:$0x1]
          %v665 = vlaneseq
          %v666 = vshrl.u32 %v665, 7
          %v667 = vsub.s32 0, %v666
          %v668 = vrot.slane %v663, %v667
          %v686 = vunpack.c.l.b16 %v647
          %v687 = vunpack.c.l.b16 %v648
          %v688 = vunpack.c.l.b16 %v649
          %v689 = vunpack.c.l.b16 %v650
          %v690 = vunpack.c.l.b16 %v651
          %v691 = vunpack.c.l.b16 %v652
          %v692 = vunpack.c.l.b16 %v653
          %v693 = vunpack.c.l.b16 %v654
          %v694 = vunpack.c.l.b16 %v655
          %v695 = vunpack.c.l.b16 %v656
          %v696 = vunpack.c.l.b16 %v657
          %v697 = vunpack.c.l.b16 %v658
          %v698 = vunpack.c.l.b16 %v659
          %v699 = vunpack.c.l.b16 %v660
          %v700 = vunpack.c.l.b16 %v661
          %v701 = vunpack.c.l.b16 %v662
          %v702 = vpack.c.b16 %v687, %v686
          %v703 = vpack.c.b16 %v689, %v688
          %v704 = vpack.c.b16 %v691, %v690
          %v705 = vpack.c.b16 %v693, %v692
          %v706 = vpack.c.b16 %v695, %v694
          %v707 = vpack.c.b16 %v697, %v696
          %v708 = vpack.c.b16 %v699, %v698
          %v709 = vpack.c.b16 %v701, %v700
          %718 = vmatprep.subr.bf16.mxu0 0
          %719 = vmatpush1.bf16.msra.mxu0 %v709
          %720 = vmatprep.subr.bf16.mxu0 0
          %721 = vmatpush1.bf16.msra.mxu0 %v708
          %722 = vmatprep.subr.bf16.mxu0 0
          %723 = vmatpush1.bf16.msra.mxu0 %v707
          %724 = vmatprep.subr.bf16.mxu0 0
          %725 = vmatpush1.bf16.msra.mxu0 %v706
          %726 = vmatprep.subr.bf16.mxu0 0
          %727 = vmatpush1.bf16.msra.mxu0 %v705
          %728 = vmatprep.subr.bf16.mxu0 0
          %729 = vmatpush1.bf16.msra.mxu0 %v704
          %730 = vmatprep.subr.bf16.mxu0 0
          %731 = vmatpush1.bf16.msra.mxu0 %v703
          %732 = vmatprep.subr.bf16.mxu0 0
          %733 = vmatpush1.bf16.msra.mxu0 %v702
          %734 = vmatprep.subr.bf16.mxu0 0
          %735 = vmatpush2.bf16.msra.mxu0 0
          %736 = vmatprep.subr.bf16.mxu0 0
          %737 = vmatpush2.bf16.msra.mxu0 0
          %738 = vmatprep.subr.bf16.mxu0 0
          %739 = vmatpush2.bf16.msra.mxu0 0
          %740 = vmatprep.subr.bf16.mxu0 0
          %741 = vmatpush2.bf16.msra.mxu0 0
          %742 = vmatprep.subr.bf16.mxu0 0
          %743 = vmatpush2.bf16.msra.mxu0 0
          %744 = vmatprep.subr.bf16.mxu0 0
          %745 = vmatpush2.bf16.msra.mxu0 0
          %746 = vmatprep.subr.bf16.mxu0 0
          %747 = vmatpush2.bf16.msra.mxu0 0
          %748 = vmatprep.subr.bf16.mxu0 0
          %749 = vmatpush2.bf16.msra.mxu0 0
          %750 = vmatprep.mubr.bf16.mxu0 0
          %751 = vmatmul.mubr.bf16.gmra.mxu0 %v643
          %v752 = vpop.f32.mrf.mxu0
          %v753 = vadd.f32 %v668, %v752
          %v754 = vpop.f32.mrf.mxu0
          %v755 = vpop.f32.mrf.mxu0
          %v756 = vadd.f32 %v668, %v755
          %v757 = vpop.f32.mrf.mxu0
          %758 = vmatprep.mubr.bf16.mxu0 0
          %759 = vmatmul.mubr.bf16.gmra.mxu0 %v644
          %v760 = vpop.f32.mrf.mxu0
          %v761 = vadd.f32 %v668, %v760
          %v762 = vpop.f32.mrf.mxu0
          %v763 = vpop.f32.mrf.mxu0
          %v764 = vadd.f32 %v668, %v763
          %v765 = vpop.f32.mrf.mxu0
          %766 = vmatprep.mubr.bf16.mxu0 0
          %767 = vmatmul.mubr.bf16.gmra.mxu0 %v645
          %v768 = vpop.f32.mrf.mxu0
          %v769 = vadd.f32 %v668, %v768
          %v770 = vpop.f32.mrf.mxu0
          %v771 = vpop.f32.mrf.mxu0
          %v772 = vadd.f32 %v668, %v771
          %v773 = vpop.f32.mrf.mxu0
          %774 = vmatprep.mubr.bf16.mxu0 0
          %775 = vmatmul.mubr.bf16.gmra.mxu0 %v646
          %v776 = vpop.f32.mrf.mxu0
          %v777 = vadd.f32 %v668, %v776
          %v778 = vpop.f32.mrf.mxu0
          %v779 = vpop.f32.mrf.mxu0
          %v780 = vadd.f32 %v668, %v779
          %v781 = vpop.f32.mrf.mxu0
          %782 = vdwg.mxu0
          %v783 = vpack.c.bf16 %v756, %v753
          %v784 = vpack.c.bf16 %v764, %v761
          %v785 = vpack.c.bf16 %v772, %v769
          %v786 = vpack.c.bf16 %v780, %v777
          %v791 = vunpack.c.l.b16 %v783
          %v792 = vunpack.c.h.b16 %v783
          %v793 = vunpack.c.l.b16 %v784
          %v794 = vunpack.c.h.b16 %v784
          %v795 = vunpack.c.l.b16 %v785
          %v796 = vunpack.c.h.b16 %v785
          %v797 = vunpack.c.l.b16 %v786
          %v798 = vunpack.c.h.b16 %v786
          %v799 = vpack.c.b16 %v791, %v791
          %v800 = vpack.c.b16 %v792, %v792
          %v801 = vpack.c.b16 %v793, %v793
          %v802 = vpack.c.b16 %v794, %v794
          %v803 = vpack.c.b16 %v795, %v795
          %v804 = vpack.c.b16 %v796, %v796
          %v805 = vpack.c.b16 %v797, %v797
          %v806 = vpack.c.b16 %v798, %v798
          %815 = vst [vmem:[#allocation2] sm:$0xf] %v799
          %816 = vst [vmem:[#allocation2 + $0x4] sm:$0xf] %v800
          %817 = vst [vmem:[#allocation2 + $0x8] sm:$0xf] %v801
          %818 = vst [vmem:[#allocation2 + $0xc] sm:$0xf] %v802
          %819 = vst [vmem:[#allocation2 + $0x10] sm:$0xf] %v803
          %820 = vst [vmem:[#allocation2 + $0x14] sm:$0xf] %v804
          %821 = vst [vmem:[#allocation2 + $0x18] sm:$0xf] %v805
          %822 = vst [vmem:[#allocation2 + $0x1c] sm:$0xf] %v806
          %vm823 = vcmask 7168
          %824 = vst.msk [vmem:[#allocation3] sm:$0xff] %vm823, -inf
          %825 = vst.msk [vmem:[#allocation3 + $0x8] sm:$0xff] %vm823, -inf
          %826 = vst.msk [vmem:[#allocation3 + $0x10] sm:$0xff] %vm823, -inf
          %827 = vst.msk [vmem:[#allocation3 + $0x18] sm:$0xff] %vm823, -inf
          %828 = vst.msk [vmem:[#allocation3 + $0x20] sm:$0xff] %vm823, -inf
          %829 = vst.msk [vmem:[#allocation3 + $0x28] sm:$0xff] %vm823, -inf
          %830 = vst.msk [vmem:[#allocation3 + $0x30] sm:$0xff] %vm823, -inf
          %831 = vst.msk [vmem:[#allocation3 + $0x38] sm:$0xff] %vm823, -inf
          %832 = vst.msk [vmem:[#allocation4] sm:$0xff] %vm823, 0.0
          %833 = vst.msk [vmem:[#allocation4 + $0x8] sm:$0xff] %vm823, 0.0
          %834 = vst.msk [vmem:[#allocation4 + $0x10] sm:$0xff] %vm823, 0.0
          %835 = vst.msk [vmem:[#allocation4 + $0x18] sm:$0xff] %vm823, 0.0
          %836 = vst.msk [vmem:[#allocation4 + $0x20] sm:$0xff] %vm823, 0.0
          %837 = vst.msk [vmem:[#allocation4 + $0x28] sm:$0xff] %vm823, 0.0
          %838 = vst.msk [vmem:[#allocation4 + $0x30] sm:$0xff] %vm823, 0.0
          %839 = vst.msk [vmem:[#allocation4 + $0x38] sm:$0xff] %vm823, 0.0
          %840 = vst [vmem:[#allocation5] sm:$0xff] 0.0
          %841 = vst [vmem:[#allocation5 + $0x8] sm:$0xff] 0.0
          %842 = vst [vmem:[#allocation5 + $0x10] sm:$0xff] 0.0
          %843 = vst [vmem:[#allocation5 + $0x18] sm:$0xff] 0.0
          %844 = vst [vmem:[#allocation5 + $0x20] sm:$0xff] 0.0
          %845 = vst [vmem:[#allocation5 + $0x28] sm:$0xff] 0.0
          %846 = vst [vmem:[#allocation5 + $0x30] sm:$0xff] 0.0
          %847 = vst [vmem:[#allocation5 + $0x38] sm:$0xff] 0.0
        $region142: #{_attention_forward.3} parent=129 // pred_fallthru
          _
        %v848 = vld [vmem:[%s564] sm:$0xf]
        %v849 = vld [vmem:[%s564 + $0x4] sm:$0xf]
        %v850 = vld [vmem:[%s564 + $0x8] sm:$0xf]
        %v851 = vld [vmem:[%s564 + $0xc] sm:$0xf]
        %v852 = vld [vmem:[%s564 + $0x10] sm:$0xf]
        %v853 = vld [vmem:[%s564 + $0x14] sm:$0xf]
        %v854 = vld [vmem:[%s564 + $0x18] sm:$0xf]
        %v855 = vld [vmem:[%s564 + $0x1c] sm:$0xf]
        %v856 = vld [vmem:[%s564 + $0x20] sm:$0xf]
        %v857 = vld [vmem:[%s564 + $0x24] sm:$0xf]
        %v858 = vld [vmem:[%s564 + $0x28] sm:$0xf]
        %v859 = vld [vmem:[%s564 + $0x2c] sm:$0xf]
        %v860 = vld [vmem:[%s564 + $0x30] sm:$0xf]
        %v861 = vld [vmem:[%s564 + $0x34] sm:$0xf]
        %v862 = vld [vmem:[%s564 + $0x38] sm:$0xf]
        %v863 = vld [vmem:[%s564 + $0x3c] sm:$0xf]
        %v864 = vld [vmem:[%s571] sm:$0xf]
        %v865 = vld [vmem:[%s571 + $0x4] sm:$0xf]
        %v866 = vld [vmem:[%s571 + $0x8] sm:$0xf]
        %v867 = vld [vmem:[%s571 + $0xc] sm:$0xf]
        %v868 = vld [vmem:[%s571 + $0x10] sm:$0xf]
        %v869 = vld [vmem:[%s571 + $0x14] sm:$0xf]
        %v870 = vld [vmem:[%s571 + $0x18] sm:$0xf]
        %v871 = vld [vmem:[%s571 + $0x1c] sm:$0xf]
        %v872 = vld [vmem:[%s571 + $0x20] sm:$0xf]
        %v873 = vld [vmem:[%s571 + $0x24] sm:$0xf]
        %v874 = vld [vmem:[%s571 + $0x28] sm:$0xf]
        %v875 = vld [vmem:[%s571 + $0x2c] sm:$0xf]
        %v876 = vld [vmem:[%s571 + $0x30] sm:$0xf]
        %v877 = vld [vmem:[%s571 + $0x34] sm:$0xf]
        %v878 = vld [vmem:[%s571 + $0x38] sm:$0xf]
        %v879 = vld [vmem:[%s571 + $0x3c] sm:$0xf]
        %v880 = vld [vmem:[#allocation2] sm:$0xf]
        %v881 = vld [vmem:[#allocation2 + $0x4] sm:$0xf]
        %v882 = vld [vmem:[#allocation2 + $0x8] sm:$0xf]
        %v883 = vld [vmem:[#allocation2 + $0xc] sm:$0xf]
        %v884 = vld [vmem:[#allocation2 + $0x10] sm:$0xf]
        %v885 = vld [vmem:[#allocation2 + $0x14] sm:$0xf]
        %v886 = vld [vmem:[#allocation2 + $0x18] sm:$0xf]
        %v887 = vld [vmem:[#allocation2 + $0x1c] sm:$0xf]
        %v896 = vunpack.c.l.b16 %v880
        %v897 = vunpack.c.l.b16 %v881
        %v898 = vunpack.c.l.b16 %v882
        %v899 = vunpack.c.l.b16 %v883
        %v900 = vunpack.c.l.b16 %v884
        %v901 = vunpack.c.l.b16 %v885
        %v902 = vunpack.c.l.b16 %v886
        %v903 = vunpack.c.l.b16 %v887
        %v904 = vpack.c.b16 %v897, %v896
        %v905 = vpack.c.b16 %v899, %v898
        %v906 = vpack.c.b16 %v901, %v900
        %v907 = vpack.c.b16 %v903, %v902
        %v928 = vunpack.c.l.b16 %v848
        %v929 = vunpack.c.l.b16 %v849
        %v930 = vunpack.c.l.b16 %v850
        %v931 = vunpack.c.l.b16 %v851
        %v932 = vunpack.c.l.b16 %v852
        %v933 = vunpack.c.l.b16 %v853
        %v934 = vunpack.c.l.b16 %v854
        %v935 = vunpack.c.l.b16 %v855
        %v936 = vunpack.c.l.b16 %v856
        %v937 = vunpack.c.l.b16 %v857
        %v938 = vunpack.c.l.b16 %v858
        %v939 = vunpack.c.l.b16 %v859
        %v940 = vunpack.c.l.b16 %v860
        %v941 = vunpack.c.l.b16 %v861
        %v942 = vunpack.c.l.b16 %v862
        %v943 = vunpack.c.l.b16 %v863
        %v944 = vpack.c.b16 %v929, %v928
        %v945 = vpack.c.b16 %v931, %v930
        %v946 = vpack.c.b16 %v933, %v932
        %v947 = vpack.c.b16 %v935, %v934
        %v948 = vpack.c.b16 %v937, %v936
        %v949 = vpack.c.b16 %v939, %v938
        %v950 = vpack.c.b16 %v941, %v940
        %v951 = vpack.c.b16 %v943, %v942
        %960 = vmatprep.subr.bf16.mxu0 0
        %961 = vmatpush1.bf16.xpose.msra.mxu0 %v951
        %962 = vmatprep.subr.bf16.mxu0 0
        %963 = vmatpush1.bf16.xpose.msra.mxu0 %v950
        %964 = vmatprep.subr.bf16.mxu0 0
        %965 = vmatpush1.bf16.xpose.msra.mxu0 %v949
        %966 = vmatprep.subr.bf16.mxu0 0
        %967 = vmatpush1.bf16.xpose.msra.mxu0 %v948
        %968 = vmatprep.subr.bf16.mxu0 0
        %969 = vmatpush1.bf16.xpose.msra.mxu0 %v947
        %970 = vmatprep.subr.bf16.mxu0 0
        %971 = vmatpush1.bf16.xpose.msra.mxu0 %v946
        %972 = vmatprep.subr.bf16.mxu0 0
        %973 = vmatpush1.bf16.xpose.msra.mxu0 %v945
        %974 = vmatprep.subr.bf16.mxu0 0
        %975 = vmatpush1.bf16.xpose.msra.mxu0 %v944
        %976 = vmatprep.subr.bf16.mxu0 0
        %977 = vmatpush2.bf16.xpose.msra.mxu0 0
        %978 = vmatprep.subr.bf16.mxu0 0
        %979 = vmatpush2.bf16.xpose.msra.mxu0 0
        %980 = vmatprep.subr.bf16.mxu0 0
        %981 = vmatpush2.bf16.xpose.msra.mxu0 0
        %982 = vmatprep.subr.bf16.mxu0 0
        %983 = vmatpush2.bf16.xpose.msra.mxu0 0
        %984 = vmatprep.subr.bf16.mxu0 0
        %985 = vmatpush2.bf16.xpose.msra.mxu0 0
        %986 = vmatprep.subr.bf16.mxu0 0
        %987 = vmatpush2.bf16.xpose.msra.mxu0 0
        %988 = vmatprep.subr.bf16.mxu0 0
        %989 = vmatpush2.bf16.xpose.msra.mxu0 0
        %990 = vmatprep.subr.bf16.mxu0 0
        %991 = vmatpush2.bf16.xpose.msra.mxu0 0
        %992 = vmatprep.mubr.bf16.mxu0 0
        %993 = vmatmul.mubr.bf16.gmra.mxu0 %v904
        %v994 = vpop.f32.mrf.mxu0
        %v995 = vadd.f32 0.0, %v994
        %v996 = vpop.f32.mrf.mxu0
        %v997 = vpop.f32.mrf.mxu0
        %v998 = vadd.f32 0.0, %v997
        %v999 = vpop.f32.mrf.mxu0
        %1000 = vmatprep.mubr.bf16.mxu0 0
        %1001 = vmatmul.mubr.bf16.gmra.mxu0 %v905
        %v1002 = vpop.f32.mrf.mxu0
        %v1003 = vadd.f32 0.0, %v1002
        %v1004 = vpop.f32.mrf.mxu0
        %v1005 = vpop.f32.mrf.mxu0
        %v1006 = vadd.f32 0.0, %v1005
        %v1007 = vpop.f32.mrf.mxu0
        %1008 = vmatprep.mubr.bf16.mxu0 0
        %1009 = vmatmul.mubr.bf16.gmra.mxu0 %v906
        %v1010 = vpop.f32.mrf.mxu0
        %v1011 = vadd.f32 0.0, %v1010
        %v1012 = vpop.f32.mrf.mxu0
        %v1013 = vpop.f32.mrf.mxu0
        %v1014 = vadd.f32 0.0, %v1013
        %v1015 = vpop.f32.mrf.mxu0
        %1016 = vmatprep.mubr.bf16.mxu0 0
        %1017 = vmatmul.mubr.bf16.gmra.mxu0 %v907
        %v1018 = vpop.f32.mrf.mxu0
        %v1019 = vadd.f32 0.0, %v1018
        %v1020 = vpop.f32.mrf.mxu0
        %v1021 = vpop.f32.mrf.mxu0
        %v1022 = vadd.f32 0.0, %v1021
        %v1023 = vpop.f32.mrf.mxu0
        %1024 = vdwg.mxu0
        %v1025 = vld [vmem:[#allocation3] sm:$0xff]
        %v1026 = vld [vmem:[#allocation3 + $0x8] sm:$0xff]
        %v1027 = vld [vmem:[#allocation3 + $0x10] sm:$0xff]
        %v1028 = vld [vmem:[#allocation3 + $0x18] sm:$0xff]
        %v1029 = vld [vmem:[#allocation3 + $0x20] sm:$0xff]
        %v1030 = vld [vmem:[#allocation3 + $0x28] sm:$0xff]
        %v1031 = vld [vmem:[#allocation3 + $0x30] sm:$0xff]
        %v1032 = vld [vmem:[#allocation3 + $0x38] sm:$0xff]
        %1033 = vmax.xlane.f32.xlu0 %v995
        %v1034 = vpop.xlane.xlu0 %1033
        %1035 = vmax.xlane.f32.xlu0 %v998
        %v1036 = vpop.xlane.xlu0 %1035
        %1037 = vmax.xlane.f32.xlu0 %v1003
        %v1038 = vpop.xlane.xlu0 %1037
        %1039 = vmax.xlane.f32.xlu0 %v1006
        %v1040 = vpop.xlane.xlu0 %1039
        %1041 = vmax.xlane.f32.xlu0 %v1011
        %v1042 = vpop.xlane.xlu0 %1041
        %1043 = vmax.xlane.f32.xlu0 %v1014
        %v1044 = vpop.xlane.xlu0 %1043
        %1045 = vmax.xlane.f32.xlu0 %v1019
        %v1046 = vpop.xlane.xlu0 %1045
        %1047 = vmax.xlane.f32.xlu0 %v1022
        %v1048 = vpop.xlane.xlu0 %1047
        %v1049 = vmax.f32 %v1025, %v1034
        %v1050 = vmax.f32 %v1026, %v1036
        %v1051 = vmax.f32 %v1027, %v1038
        %v1052 = vmax.f32 %v1028, %v1040
        %v1053 = vmax.f32 %v1029, %v1042
        %v1054 = vmax.f32 %v1030, %v1044
        %v1055 = vmax.f32 %v1031, %v1046
        %v1056 = vmax.f32 %v1032, %v1048
        %v1057 = vsub.f32 %v1025, %v1049
        %v1058 = vsub.f32 %v1026, %v1050
        %v1059 = vsub.f32 %v1027, %v1051
        %v1060 = vsub.f32 %v1028, %v1052
        %v1061 = vsub.f32 %v1029, %v1053
        %v1062 = vsub.f32 %v1030, %v1054
        %v1063 = vsub.f32 %v1031, %v1055
        %v1064 = vsub.f32 %v1032, %v1056
        %v1065 = vmul.f32 %v1057, 1.442695
        %v1066 = vpow.pop %v1065
        %v1067 = vmul.f32 %v1058, 1.442695
        %v1068 = vpow.pop %v1067
        %v1069 = vmul.f32 %v1059, 1.442695
        %v1070 = vpow.pop %v1069
        %v1071 = vmul.f32 %v1060, 1.442695
        %v1072 = vpow.pop %v1071
        %v1073 = vmul.f32 %v1061, 1.442695
        %v1074 = vpow.pop %v1073
        %v1075 = vmul.f32 %v1062, 1.442695
        %v1076 = vpow.pop %v1075
        %v1077 = vmul.f32 %v1063, 1.442695
        %v1078 = vpow.pop %v1077
        %v1079 = vmul.f32 %v1064, 1.442695
        %v1080 = vpow.pop %v1079
        %1082 = vset.pattern.permute.xlu0 0
        %1083 = vperm.xlu0 %1082, %v1049
        %v1084 = vpop.permute.xlu0 %1083
        %1087 = vset.pattern.permute.xlu0 0
        %1088 = vperm.xlu0 %1087, %v1050
        %v1089 = vpop.permute.xlu0 %1088
        %1092 = vset.pattern.permute.xlu0 0
        %1093 = vperm.xlu0 %1092, %v1051
        %v1094 = vpop.permute.xlu0 %1093
        %1097 = vset.pattern.permute.xlu0 0
        %1098 = vperm.xlu0 %1097, %v1052
        %v1099 = vpop.permute.xlu0 %1098
        %1102 = vset.pattern.permute.xlu0 0
        %1103 = vperm.xlu0 %1102, %v1053
        %v1104 = vpop.permute.xlu0 %1103
        %1107 = vset.pattern.permute.xlu0 0
        %1108 = vperm.xlu0 %1107, %v1054
        %v1109 = vpop.permute.xlu0 %1108
        %1112 = vset.pattern.permute.xlu0 0
        %1113 = vperm.xlu0 %1112, %v1055
        %v1114 = vpop.permute.xlu0 %1113
        %1117 = vset.pattern.permute.xlu0 0
        %1118 = vperm.xlu0 %1117, %v1056
        %v1119 = vpop.permute.xlu0 %1118
        %v1121 = vsub.f32 %v995, %v1084
        %v1122 = vsub.f32 %v998, %v1089
        %v1123 = vsub.f32 %v1003, %v1094
        %v1124 = vsub.f32 %v1006, %v1099
        %v1125 = vsub.f32 %v1011, %v1104
        %v1126 = vsub.f32 %v1014, %v1109
        %v1127 = vsub.f32 %v1019, %v1114
        %v1128 = vsub.f32 %v1022, %v1119
        %v1129 = vmul.f32 %v1121, 1.442695
        %v1130 = vpow.pop %v1129
        %v1131 = vmul.f32 %v1122, 1.442695
        %v1132 = vpow.pop %v1131
        %v1133 = vmul.f32 %v1123, 1.442695
        %v1134 = vpow.pop %v1133
        %v1135 = vmul.f32 %v1124, 1.442695
        %v1136 = vpow.pop %v1135
        %v1137 = vmul.f32 %v1125, 1.442695
        %v1138 = vpow.pop %v1137
        %v1139 = vmul.f32 %v1126, 1.442695
        %v1140 = vpow.pop %v1139
        %v1141 = vmul.f32 %v1127, 1.442695
        %v1142 = vpow.pop %v1141
        %v1143 = vmul.f32 %v1128, 1.442695
        %v1144 = vpow.pop %v1143
        %1145 = vadd.xlane.f32.xlu0 %v1130
        %v1146 = vpop.xlane.xlu0 %1145
        %1147 = vadd.xlane.f32.xlu0 %v1132
        %v1148 = vpop.xlane.xlu0 %1147
        %1149 = vadd.xlane.f32.xlu0 %v1134
        %v1150 = vpop.xlane.xlu0 %1149
        %1151 = vadd.xlane.f32.xlu0 %v1136
        %v1152 = vpop.xlane.xlu0 %1151
        %1153 = vadd.xlane.f32.xlu0 %v1138
        %v1154 = vpop.xlane.xlu0 %1153
        %1155 = vadd.xlane.f32.xlu0 %v1140
        %v1156 = vpop.xlane.xlu0 %1155
        %1157 = vadd.xlane.f32.xlu0 %v1142
        %v1158 = vpop.xlane.xlu0 %1157
        %1159 = vadd.xlane.f32.xlu0 %v1144
        %v1160 = vpop.xlane.xlu0 %1159
        %v1161 = vpack.c.bf16 %v1132, %v1130
        %v1162 = vpack.c.bf16 %v1136, %v1134
        %v1163 = vpack.c.bf16 %v1140, %v1138
        %v1164 = vpack.c.bf16 %v1144, %v1142
        %v1165 = vld [vmem:[#allocation4] sm:$0xff]
        %v1166 = vld [vmem:[#allocation4 + $0x8] sm:$0xff]
        %v1167 = vld [vmem:[#allocation4 + $0x10] sm:$0xff]
        %v1168 = vld [vmem:[#allocation4 + $0x18] sm:$0xff]
        %v1169 = vld [vmem:[#allocation4 + $0x20] sm:$0xff]
        %v1170 = vld [vmem:[#allocation4 + $0x28] sm:$0xff]
        %v1171 = vld [vmem:[#allocation4 + $0x30] sm:$0xff]
        %v1172 = vld [vmem:[#allocation4 + $0x38] sm:$0xff]
        %v1173 = vmul.f32 %v1066, %v1165
        %v1174 = vmul.f32 %v1068, %v1166
        %v1175 = vmul.f32 %v1070, %v1167
        %v1176 = vmul.f32 %v1072, %v1168
        %v1177 = vmul.f32 %v1074, %v1169
        %v1178 = vmul.f32 %v1076, %v1170
        %v1179 = vmul.f32 %v1078, %v1171
        %v1180 = vmul.f32 %v1080, %v1172
        %v1181 = vadd.f32 %v1173, %v1146
        %v1182 = vadd.f32 %v1174, %v1148
        %v1183 = vadd.f32 %v1175, %v1150
        %v1184 = vadd.f32 %v1176, %v1152
        %v1185 = vadd.f32 %v1177, %v1154
        %v1186 = vadd.f32 %v1178, %v1156
        %v1187 = vadd.f32 %v1179, %v1158
        %v1188 = vadd.f32 %v1180, %v1160
        %vm1189 = vcmask 7168
        %1190 = vst.msk [vmem:[#allocation4] sm:$0xff] %vm1189, %v1181
        %1191 = vst.msk [vmem:[#allocation4 + $0x8] sm:$0xff] %vm1189, %v1182
        %1192 = vst.msk [vmem:[#allocation4 + $0x10] sm:$0xff] %vm1189, %v1183
        %1193 = vst.msk [vmem:[#allocation4 + $0x18] sm:$0xff] %vm1189, %v1184
        %1194 = vst.msk [vmem:[#allocation4 + $0x20] sm:$0xff] %vm1189, %v1185
        %1195 = vst.msk [vmem:[#allocation4 + $0x28] sm:$0xff] %vm1189, %v1186
        %1196 = vst.msk [vmem:[#allocation4 + $0x30] sm:$0xff] %vm1189, %v1187
        %1197 = vst.msk [vmem:[#allocation4 + $0x38] sm:$0xff] %vm1189, %v1188
        %v1198 = vld [vmem:[#allocation5] sm:$0xff]
        %v1199 = vld [vmem:[#allocation5 + $0x8] sm:$0xff]
        %v1200 = vld [vmem:[#allocation5 + $0x10] sm:$0xff]
        %v1201 = vld [vmem:[#allocation5 + $0x18] sm:$0xff]
        %v1202 = vld [vmem:[#allocation5 + $0x20] sm:$0xff]
        %v1203 = vld [vmem:[#allocation5 + $0x28] sm:$0xff]
        %v1204 = vld [vmem:[#allocation5 + $0x30] sm:$0xff]
        %v1205 = vld [vmem:[#allocation5 + $0x38] sm:$0xff]
        %1207 = vset.pattern.permute.xlu0 0
        %1208 = vperm.xlu0 %1207, %v1066
        %v1209 = vpop.permute.xlu0 %1208
        %1212 = vset.pattern.permute.xlu0 0
        %1213 = vperm.xlu0 %1212, %v1068
        %v1214 = vpop.permute.xlu0 %1213
        %1217 = vset.pattern.permute.xlu0 0
        %1218 = vperm.xlu0 %1217, %v1070
        %v1219 = vpop.permute.xlu0 %1218
        %1222 = vset.pattern.permute.xlu0 0
        %1223 = vperm.xlu0 %1222, %v1072
        %v1224 = vpop.permute.xlu0 %1223
        %1227 = vset.pattern.permute.xlu0 0
        %1228 = vperm.xlu0 %1227, %v1074
        %v1229 = vpop.permute.xlu0 %1228
        %1232 = vset.pattern.permute.xlu0 0
        %1233 = vperm.xlu0 %1232, %v1076
        %v1234 = vpop.permute.xlu0 %1233
        %1237 = vset.pattern.permute.xlu0 0
        %1238 = vperm.xlu0 %1237, %v1078
        %v1239 = vpop.permute.xlu0 %1238
        %1242 = vset.pattern.permute.xlu0 0
        %1243 = vperm.xlu0 %1242, %v1080
        %v1244 = vpop.permute.xlu0 %1243
        %v1246 = vmul.f32 %v1209, %v1198
        %v1247 = vmul.f32 %v1214, %v1199
        %v1248 = vmul.f32 %v1219, %v1200
        %v1249 = vmul.f32 %v1224, %v1201
        %v1250 = vmul.f32 %v1229, %v1202
        %v1251 = vmul.f32 %v1234, %v1203
        %v1252 = vmul.f32 %v1239, %v1204
        %v1253 = vmul.f32 %v1244, %v1205
        %v1270 = vunpack.c.l.b16 %v864
        %v1271 = vunpack.c.l.b16 %v865
        %v1272 = vunpack.c.l.b16 %v866
        %v1273 = vunpack.c.l.b16 %v867
        %v1274 = vunpack.c.l.b16 %v868
        %v1275 = vunpack.c.l.b16 %v869
        %v1276 = vunpack.c.l.b16 %v870
        %v1277 = vunpack.c.l.b16 %v871
        %v1278 = vunpack.c.l.b16 %v872
        %v1279 = vunpack.c.l.b16 %v873
        %v1280 = vunpack.c.l.b16 %v874
        %v1281 = vunpack.c.l.b16 %v875
        %v1282 = vunpack.c.l.b16 %v876
        %v1283 = vunpack.c.l.b16 %v877
        %v1284 = vunpack.c.l.b16 %v878
        %v1285 = vunpack.c.l.b16 %v879
        %v1286 = vpack.c.b16 %v1271, %v1270
        %v1287 = vpack.c.b16 %v1273, %v1272
        %v1288 = vpack.c.b16 %v1275, %v1274
        %v1289 = vpack.c.b16 %v1277, %v1276
        %v1290 = vpack.c.b16 %v1279, %v1278
        %v1291 = vpack.c.b16 %v1281, %v1280
        %v1292 = vpack.c.b16 %v1283, %v1282
        %v1293 = vpack.c.b16 %v1285, %v1284
        %1302 = vmatprep.subr.bf16.mxu0 0
        %1303 = vmatpush1.bf16.msra.mxu0 %v1293
        %1304 = vmatprep.subr.bf16.mxu0 0
        %1305 = vmatpush1.bf16.msra.mxu0 %v1292
        %1306 = vmatprep.subr.bf16.mxu0 0
        %1307 = vmatpush1.bf16.msra.mxu0 %v1291
        %1308 = vmatprep.subr.bf16.mxu0 0
        %1309 = vmatpush1.bf16.msra.mxu0 %v1290
        %1310 = vmatprep.subr.bf16.mxu0 0
        %1311 = vmatpush1.bf16.msra.mxu0 %v1289
        %1312 = vmatprep.subr.bf16.mxu0 0
        %1313 = vmatpush1.bf16.msra.mxu0 %v1288
        %1314 = vmatprep.subr.bf16.mxu0 0
        %1315 = vmatpush1.bf16.msra.mxu0 %v1287
        %1316 = vmatprep.subr.bf16.mxu0 0
        %1317 = vmatpush1.bf16.msra.mxu0 %v1286
        %1318 = vmatprep.subr.bf16.mxu0 0
        %1319 = vmatpush2.bf16.msra.mxu0 0
        %1320 = vmatprep.subr.bf16.mxu0 0
        %1321 = vmatpush2.bf16.msra.mxu0 0
        %1322 = vmatprep.subr.bf16.mxu0 0
        %1323 = vmatpush2.bf16.msra.mxu0 0
        %1324 = vmatprep.subr.bf16.mxu0 0
        %1325 = vmatpush2.bf16.msra.mxu0 0
        %1326 = vmatprep.subr.bf16.mxu0 0
        %1327 = vmatpush2.bf16.msra.mxu0 0
        %1328 = vmatprep.subr.bf16.mxu0 0
        %1329 = vmatpush2.bf16.msra.mxu0 0
        %1330 = vmatprep.subr.bf16.mxu0 0
        %1331 = vmatpush2.bf16.msra.mxu0 0
        %1332 = vmatprep.subr.bf16.mxu0 0
        %1333 = vmatpush2.bf16.msra.mxu0 0
        %1334 = vmatprep.mubr.bf16.mxu0 0
        %1335 = vmatmul.mubr.bf16.gmra.mxu0 %v1161
        %v1336 = vpop.f32.mrf.mxu0
        %v1337 = vadd.f32 0.0, %v1336
        %v1338 = vpop.f32.mrf.mxu0
        %v1339 = vpop.f32.mrf.mxu0
        %v1340 = vadd.f32 0.0, %v1339
        %v1341 = vpop.f32.mrf.mxu0
        %1342 = vmatprep.mubr.bf16.mxu0 0
        %1343 = vmatmul.mubr.bf16.gmra.mxu0 %v1162
        %v1344 = vpop.f32.mrf.mxu0
        %v1345 = vadd.f32 0.0, %v1344
        %v1346 = vpop.f32.mrf.mxu0
        %v1347 = vpop.f32.mrf.mxu0
        %v1348 = vadd.f32 0.0, %v1347
        %v1349 = vpop.f32.mrf.mxu0
        %1350 = vmatprep.mubr.bf16.mxu0 0
        %1351 = vmatmul.mubr.bf16.gmra.mxu0 %v1163
        %v1352 = vpop.f32.mrf.mxu0
        %v1353 = vadd.f32 0.0, %v1352
        %v1354 = vpop.f32.mrf.mxu0
        %v1355 = vpop.f32.mrf.mxu0
        %v1356 = vadd.f32 0.0, %v1355
        %v1357 = vpop.f32.mrf.mxu0
        %1358 = vmatprep.mubr.bf16.mxu0 0
        %1359 = vmatmul.mubr.bf16.gmra.mxu0 %v1164
        %v1360 = vpop.f32.mrf.mxu0
        %v1361 = vadd.f32 0.0, %v1360
        %v1362 = vpop.f32.mrf.mxu0
        %v1363 = vpop.f32.mrf.mxu0
        %v1364 = vadd.f32 0.0, %v1363
        %v1365 = vpop.f32.mrf.mxu0
        %1366 = vdwg.mxu0
        %v1367 = vadd.f32 %v1246, %v1337
        %v1368 = vadd.f32 %v1247, %v1340
        %v1369 = vadd.f32 %v1248, %v1345
        %v1370 = vadd.f32 %v1249, %v1348
        %v1371 = vadd.f32 %v1250, %v1353
        %v1372 = vadd.f32 %v1251, %v1356
        %v1373 = vadd.f32 %v1252, %v1361
        %v1374 = vadd.f32 %v1253, %v1364
        %1375 = vst [vmem:[#allocation5] sm:$0xff] %v1367
        %1376 = vst [vmem:[#allocation5 + $0x8] sm:$0xff] %v1368
        %1377 = vst [vmem:[#allocation5 + $0x10] sm:$0xff] %v1369
        %1378 = vst [vmem:[#allocation5 + $0x18] sm:$0xff] %v1370
        %1379 = vst [vmem:[#allocation5 + $0x20] sm:$0xff] %v1371
        %1380 = vst [vmem:[#allocation5 + $0x28] sm:$0xff] %v1372
        %1381 = vst [vmem:[#allocation5 + $0x30] sm:$0xff] %v1373
        %1382 = vst [vmem:[#allocation5 + $0x38] sm:$0xff] %v1374
        %1383 = vst.msk [vmem:[#allocation3] sm:$0xff] %vm1189, %v1049
        %1384 = vst.msk [vmem:[#allocation3 + $0x8] sm:$0xff] %vm1189, %v1050
        %1385 = vst.msk [vmem:[#allocation3 + $0x10] sm:$0xff] %vm1189, %v1051
        %1386 = vst.msk [vmem:[#allocation3 + $0x18] sm:$0xff] %vm1189, %v1052
        %1387 = vst.msk [vmem:[#allocation3 + $0x20] sm:$0xff] %vm1189, %v1053
        %1388 = vst.msk [vmem:[#allocation3 + $0x28] sm:$0xff] %vm1189, %v1054
        %1389 = vst.msk [vmem:[#allocation3 + $0x30] sm:$0xff] %vm1189, %v1055
        %1390 = vst.msk [vmem:[#allocation3 + $0x38] sm:$0xff] %vm1189, %v1056
        // Predicated region
        $region143: #{_attention_forward.3} parent=129 // pred_check
          %p1391 = pneg %p631
        $region144: #{_attention_forward.3} parent=129 // pred_check_branch
          %1393 = sbr.rel (%p1391) target = $region146
        $region145: #{_attention_forward.3} parent=129 // pred_region
          %v1394 = vld [vmem:[#allocation5] sm:$0xff]
          %v1395 = vld [vmem:[#allocation5 + $0x8] sm:$0xff]
          %v1396 = vld [vmem:[#allocation5 + $0x10] sm:$0xff]
          %v1397 = vld [vmem:[#allocation5 + $0x18] sm:$0xff]
          %v1398 = vld [vmem:[#allocation5 + $0x20] sm:$0xff]
          %v1399 = vld [vmem:[#allocation5 + $0x28] sm:$0xff]
          %v1400 = vld [vmem:[#allocation5 + $0x30] sm:$0xff]
          %v1401 = vld [vmem:[#allocation5 + $0x38] sm:$0xff]
          %v1402 = vld [vmem:[#allocation4] sm:$0xff]
          %v1403 = vld [vmem:[#allocation4 + $0x8] sm:$0xff]
          %v1404 = vld [vmem:[#allocation4 + $0x10] sm:$0xff]
          %v1405 = vld [vmem:[#allocation4 + $0x18] sm:$0xff]
          %v1406 = vld [vmem:[#allocation4 + $0x20] sm:$0xff]
          %v1407 = vld [vmem:[#allocation4 + $0x28] sm:$0xff]
          %v1408 = vld [vmem:[#allocation4 + $0x30] sm:$0xff]
          %v1409 = vld [vmem:[#allocation4 + $0x38] sm:$0xff]
          %v1410 = vrcp.pop %v1402
          %v1411 = vrcp.pop %v1403
          %v1412 = vrcp.pop %v1404
          %v1413 = vrcp.pop %v1405
          %v1414 = vrcp.pop %v1406
          %v1415 = vrcp.pop %v1407
          %v1416 = vrcp.pop %v1408
          %v1417 = vrcp.pop %v1409
          %1419 = vset.pattern.permute.xlu0 0
          %1420 = vperm.xlu0 %1419, %v1410
          %v1421 = vpop.permute.xlu0 %1420
          %1424 = vset.pattern.permute.xlu0 0
          %1425 = vperm.xlu0 %1424, %v1411
          %v1426 = vpop.permute.xlu0 %1425
          %1429 = vset.pattern.permute.xlu0 0
          %1430 = vperm.xlu0 %1429, %v1412
          %v1431 = vpop.permute.xlu0 %1430
          %1434 = vset.pattern.permute.xlu0 0
          %1435 = vperm.xlu0 %1434, %v1413
          %v1436 = vpop.permute.xlu0 %1435
          %1439 = vset.pattern.permute.xlu0 0
          %1440 = vperm.xlu0 %1439, %v1414
          %v1441 = vpop.permute.xlu0 %1440
          %1444 = vset.pattern.permute.xlu0 0
          %1445 = vperm.xlu0 %1444, %v1415
          %v1446 = vpop.permute.xlu0 %1445
          %1449 = vset.pattern.permute.xlu0 0
          %1450 = vperm.xlu0 %1449, %v1416
          %v1451 = vpop.permute.xlu0 %1450
          %1454 = vset.pattern.permute.xlu0 0
          %1455 = vperm.xlu0 %1454, %v1417
          %v1456 = vpop.permute.xlu0 %1455
          %v1458 = vmul.f32 %v1394, %v1421
          %v1459 = vmul.f32 %v1395, %v1426
          %v1460 = vmul.f32 %v1396, %v1431
          %v1461 = vmul.f32 %v1397, %v1436
          %v1462 = vmul.f32 %v1398, %v1441
          %v1463 = vmul.f32 %v1399, %v1446
          %v1464 = vmul.f32 %v1400, %v1451
          %v1465 = vmul.f32 %v1401, %v1456
          %v1466 = vpack.c.bf16 %v1459, %v1458
          %v1467 = vpack.c.bf16 %v1461, %v1460
          %v1468 = vpack.c.bf16 %v1463, %v1462
          %v1469 = vpack.c.bf16 %v1465, %v1464
          %v1470 = vld [vmem:[%s5] sm:$0xf]
          %v1471 = vld [vmem:[%s5 + $0x4] sm:$0xf]
          %v1472 = vld [vmem:[%s5 + $0x8] sm:$0xf]
          %v1473 = vld [vmem:[%s5 + $0xc] sm:$0xf]
          %v1474 = vld [vmem:[%s5 + $0x10] sm:$0xf]
          %v1475 = vld [vmem:[%s5 + $0x14] sm:$0xf]
          %v1476 = vld [vmem:[%s5 + $0x18] sm:$0xf]
          %v1477 = vld [vmem:[%s5 + $0x1c] sm:$0xf]
          %v1478 = vld [vmem:[%s5 + $0x20] sm:$0xf]
          %v1479 = vld [vmem:[%s5 + $0x24] sm:$0xf]
          %v1480 = vld [vmem:[%s5 + $0x28] sm:$0xf]
          %v1481 = vld [vmem:[%s5 + $0x2c] sm:$0xf]
          %v1482 = vld [vmem:[%s5 + $0x30] sm:$0xf]
          %v1483 = vld [vmem:[%s5 + $0x34] sm:$0xf]
          %v1484 = vld [vmem:[%s5 + $0x38] sm:$0xf]
          %v1485 = vld [vmem:[%s5 + $0x3c] sm:$0xf]
          %v1486 = vld [vmem:[%s6] sm:$0x1]
          %v1488 = vlaneseq
          %v1489 = vshrl.u32 %v1488, 7
          %v1490 = vsub.s32 0, %v1489
          %v1491 = vrot.slane %v1486, %v1490
          %v1509 = vunpack.c.l.b16 %v1470
          %v1510 = vunpack.c.l.b16 %v1471
          %v1511 = vunpack.c.l.b16 %v1472
          %v1512 = vunpack.c.l.b16 %v1473
          %v1513 = vunpack.c.l.b16 %v1474
          %v1514 = vunpack.c.l.b16 %v1475
          %v1515 = vunpack.c.l.b16 %v1476
          %v1516 = vunpack.c.l.b16 %v1477
          %v1517 = vunpack.c.l.b16 %v1478
          %v1518 = vunpack.c.l.b16 %v1479
          %v1519 = vunpack.c.l.b16 %v1480
          %v1520 = vunpack.c.l.b16 %v1481
          %v1521 = vunpack.c.l.b16 %v1482
          %v1522 = vunpack.c.l.b16 %v1483
          %v1523 = vunpack.c.l.b16 %v1484
          %v1524 = vunpack.c.l.b16 %v1485
          %v1525 = vpack.c.b16 %v1510, %v1509
          %v1526 = vpack.c.b16 %v1512, %v1511
          %v1527 = vpack.c.b16 %v1514, %v1513
          %v1528 = vpack.c.b16 %v1516, %v1515
          %v1529 = vpack.c.b16 %v1518, %v1517
          %v1530 = vpack.c.b16 %v1520, %v1519
          %v1531 = vpack.c.b16 %v1522, %v1521
          %v1532 = vpack.c.b16 %v1524, %v1523
          %1541 = vmatprep.subr.bf16.mxu0 0
          %1542 = vmatpush1.bf16.msra.mxu0 %v1532
          %1543 = vmatprep.subr.bf16.mxu0 0
          %1544 = vmatpush1.bf16.msra.mxu0 %v1531
          %1545 = vmatprep.subr.bf16.mxu0 0
          %1546 = vmatpush1.bf16.msra.mxu0 %v1530
          %1547 = vmatprep.subr.bf16.mxu0 0
          %1548 = vmatpush1.bf16.msra.mxu0 %v1529
          %1549 = vmatprep.subr.bf16.mxu0 0
          %1550 = vmatpush1.bf16.msra.mxu0 %v1528
          %1551 = vmatprep.subr.bf16.mxu0 0
          %1552 = vmatpush1.bf16.msra.mxu0 %v1527
          %1553 = vmatprep.subr.bf16.mxu0 0
          %1554 = vmatpush1.bf16.msra.mxu0 %v1526
          %1555 = vmatprep.subr.bf16.mxu0 0
          %1556 = vmatpush1.bf16.msra.mxu0 %v1525
          %1557 = vmatprep.subr.bf16.mxu0 0
          %1558 = vmatpush2.bf16.msra.mxu0 0
          %1559 = vmatprep.subr.bf16.mxu0 0
          %1560 = vmatpush2.bf16.msra.mxu0 0
          %1561 = vmatprep.subr.bf16.mxu0 0
          %1562 = vmatpush2.bf16.msra.mxu0 0
          %1563 = vmatprep.subr.bf16.mxu0 0
          %1564 = vmatpush2.bf16.msra.mxu0 0
          %1565 = vmatprep.subr.bf16.mxu0 0
          %1566 = vmatpush2.bf16.msra.mxu0 0
          %1567 = vmatprep.subr.bf16.mxu0 0
          %1568 = vmatpush2.bf16.msra.mxu0 0
          %1569 = vmatprep.subr.bf16.mxu0 0
          %1570 = vmatpush2.bf16.msra.mxu0 0
          %1571 = vmatprep.subr.bf16.mxu0 0
          %1572 = vmatpush2.bf16.msra.mxu0 0
          %1573 = vmatprep.mubr.bf16.mxu0 0
          %1574 = vmatmul.mubr.bf16.gmra.mxu0 %v1466
          %v1575 = vpop.f32.mrf.mxu0
          %v1576 = vadd.f32 %v1491, %v1575
          %v1577 = vpop.f32.mrf.mxu0
          %v1578 = vpop.f32.mrf.mxu0
          %v1579 = vadd.f32 %v1491, %v1578
          %v1580 = vpop.f32.mrf.mxu0
          %1581 = vmatprep.mubr.bf16.mxu0 0
          %1582 = vmatmul.mubr.bf16.gmra.mxu0 %v1467
          %v1583 = vpop.f32.mrf.mxu0
          %v1584 = vadd.f32 %v1491, %v1583
          %v1585 = vpop.f32.mrf.mxu0
          %v1586 = vpop.f32.mrf.mxu0
          %v1587 = vadd.f32 %v1491, %v1586
          %v1588 = vpop.f32.mrf.mxu0
          %1589 = vmatprep.mubr.bf16.mxu0 0
          %1590 = vmatmul.mubr.bf16.gmra.mxu0 %v1468
          %v1591 = vpop.f32.mrf.mxu0
          %v1592 = vadd.f32 %v1491, %v1591
          %v1593 = vpop.f32.mrf.mxu0
          %v1594 = vpop.f32.mrf.mxu0
          %v1595 = vadd.f32 %v1491, %v1594
          %v1596 = vpop.f32.mrf.mxu0
          %1597 = vmatprep.mubr.bf16.mxu0 0
          %1598 = vmatmul.mubr.bf16.gmra.mxu0 %v1469
          %v1599 = vpop.f32.mrf.mxu0
          %v1600 = vadd.f32 %v1491, %v1599
          %v1601 = vpop.f32.mrf.mxu0
          %v1602 = vpop.f32.mrf.mxu0
          %v1603 = vadd.f32 %v1491, %v1602
          %v1604 = vpop.f32.mrf.mxu0
          %1605 = vdwg.mxu0
          %v1606 = vld [vmem:[%s625] sm:$0xff]
          %v1607 = vld [vmem:[%s625 + $0x8] sm:$0xff]
          %v1608 = vld [vmem:[%s625 + $0x10] sm:$0xff]
          %v1609 = vld [vmem:[%s625 + $0x18] sm:$0xff]
          %v1610 = vld [vmem:[%s625 + $0x20] sm:$0xff]
          %v1611 = vld [vmem:[%s625 + $0x28] sm:$0xff]
          %v1612 = vld [vmem:[%s625 + $0x30] sm:$0xff]
          %v1613 = vld [vmem:[%s625 + $0x38] sm:$0xff]
          %v1614 = vadd.f32 %v1606, %v1576
          %v1615 = vadd.f32 %v1607, %v1579
          %v1616 = vadd.f32 %v1608, %v1584
          %v1617 = vadd.f32 %v1609, %v1587
          %v1618 = vadd.f32 %v1610, %v1592
          %v1619 = vadd.f32 %v1611, %v1595
          %v1620 = vadd.f32 %v1612, %v1600
          %v1621 = vadd.f32 %v1613, %v1603
          %1622 = vadd.xlane.f32.xlu0 %v1614
          %v1623 = vpop.xlane.xlu0 %1622
          %1624 = vadd.xlane.f32.xlu0 %v1615
          %v1625 = vpop.xlane.xlu0 %1624
          %1626 = vadd.xlane.f32.xlu0 %v1616
          %v1627 = vpop.xlane.xlu0 %1626
          %1628 = vadd.xlane.f32.xlu0 %v1617
          %v1629 = vpop.xlane.xlu0 %1628
          %1630 = vadd.xlane.f32.xlu0 %v1618
          %v1631 = vpop.xlane.xlu0 %1630
          %1632 = vadd.xlane.f32.xlu0 %v1619
          %v1633 = vpop.xlane.xlu0 %1632
          %1634 = vadd.xlane.f32.xlu0 %v1620
          %v1635 = vpop.xlane.xlu0 %1634
          %1636 = vadd.xlane.f32.xlu0 %v1621
          %v1637 = vpop.xlane.xlu0 %1636
          %v1638 = vrcp.pop 128.0
          %v1639 = vmul.f32 %v1623, %v1638
          %v1640 = vmul.f32 %v1625, %v1638
          %v1641 = vmul.f32 %v1627, %v1638
          %v1642 = vmul.f32 %v1629, %v1638
          %v1643 = vmul.f32 %v1631, %v1638
          %v1644 = vmul.f32 %v1633, %v1638
          %v1645 = vmul.f32 %v1635, %v1638
          %v1646 = vmul.f32 %v1637, %v1638
          %v1647 = vsub.f32 %v1614, %v1639
          %v1648 = vsub.f32 %v1615, %v1640
          %v1649 = vsub.f32 %v1616, %v1641
          %v1650 = vsub.f32 %v1617, %v1642
          %v1651 = vsub.f32 %v1618, %v1643
          %v1652 = vsub.f32 %v1619, %v1644
          %v1653 = vsub.f32 %v1620, %v1645
          %v1654 = vsub.f32 %v1621, %v1646
          %v1655 = vmul.f32 %v1647, %v1647
          %v1656 = vmul.f32 %v1648, %v1648
          %v1657 = vmul.f32 %v1649, %v1649
          %v1658 = vmul.f32 %v1650, %v1650
          %v1659 = vmul.f32 %v1651, %v1651
          %v1660 = vmul.f32 %v1652, %v1652
          %v1661 = vmul.f32 %v1653, %v1653
          %v1662 = vmul.f32 %v1654, %v1654
          %1663 = vadd.xlane.f32.xlu0 %v1655
          %v1664 = vpop.xlane.xlu0 %1663
          %1665 = vadd.xlane.f32.xlu0 %v1656
          %v1666 = vpop.xlane.xlu0 %1665
          %1667 = vadd.xlane.f32.xlu0 %v1657
          %v1668 = vpop.xlane.xlu0 %1667
          %1669 = vadd.xlane.f32.xlu0 %v1658
          %v1670 = vpop.xlane.xlu0 %1669
          %1671 = vadd.xlane.f32.xlu0 %v1659
          %v1672 = vpop.xlane.xlu0 %1671
          %1673 = vadd.xlane.f32.xlu0 %v1660
          %v1674 = vpop.xlane.xlu0 %1673
          %1675 = vadd.xlane.f32.xlu0 %v1661
          %v1676 = vpop.xlane.xlu0 %1675
          %1677 = vadd.xlane.f32.xlu0 %v1662
          %v1678 = vpop.xlane.xlu0 %1677
          %v1679 = vmul.f32 %v1664, %v1638
          %v1680 = vmul.f32 %v1666, %v1638
          %v1681 = vmul.f32 %v1668, %v1638
          %v1682 = vmul.f32 %v1670, %v1638
          %v1683 = vmul.f32 %v1672, %v1638
          %v1684 = vmul.f32 %v1674, %v1638
          %v1685 = vmul.f32 %v1676, %v1638
          %v1686 = vmul.f32 %v1678, %v1638
          %v1687 = vadd.f32 %v1679, 1e-05
          %v1688 = vadd.f32 %v1680, 1e-05
          %v1689 = vadd.f32 %v1681, 1e-05
          %v1690 = vadd.f32 %v1682, 1e-05
          %v1691 = vadd.f32 %v1683, 1e-05
          %v1692 = vadd.f32 %v1684, 1e-05
          %v1693 = vadd.f32 %v1685, 1e-05
          %v1694 = vadd.f32 %v1686, 1e-05
          %v1695 = vrsqrt.pop %v1687
          %v1696 = vrsqrt.pop %v1688
          %v1697 = vrsqrt.pop %v1689
          %v1698 = vrsqrt.pop %v1690
          %v1699 = vrsqrt.pop %v1691
          %v1700 = vrsqrt.pop %v1692
          %v1701 = vrsqrt.pop %v1693
          %v1702 = vrsqrt.pop %v1694
          %v1703 = vmul.f32 %v1647, %v1695
          %v1704 = vmul.f32 %v1648, %v1696
          %v1705 = vmul.f32 %v1649, %v1697
          %v1706 = vmul.f32 %v1650, %v1698
          %v1707 = vmul.f32 %v1651, %v1699
          %v1708 = vmul.f32 %v1652, %v1700
          %v1709 = vmul.f32 %v1653, %v1701
          %v1710 = vmul.f32 %v1654, %v1702
          %v1711 = vld [vmem:[%s7] sm:$0x1]
          %v1713 = vlaneseq
          %v1714 = vshrl.u32 %v1713, 7
          %v1715 = vsub.s32 0, %v1714
          %v1716 = vrot.slane %v1711, %v1715
          %v1718 = vmul.f32 %v1703, %v1716
          %v1719 = vmul.f32 %v1704, %v1716
          %v1720 = vmul.f32 %v1705, %v1716
          %v1721 = vmul.f32 %v1706, %v1716
          %v1722 = vmul.f32 %v1707, %v1716
          %v1723 = vmul.f32 %v1708, %v1716
          %v1724 = vmul.f32 %v1709, %v1716
          %v1725 = vmul.f32 %v1710, %v1716
          %v1726 = vld [vmem:[%s8] sm:$0x1]
          %v1728 = vlaneseq
          %v1729 = vshrl.u32 %v1728, 7
          %v1730 = vsub.s32 0, %v1729
          %v1731 = vrot.slane %v1726, %v1730
          %v1733 = vadd.f32 %v1718, %v1731
          %v1734 = vadd.f32 %v1719, %v1731
          %v1735 = vadd.f32 %v1720, %v1731
          %v1736 = vadd.f32 %v1721, %v1731
          %v1737 = vadd.f32 %v1722, %v1731
          %v1738 = vadd.f32 %v1723, %v1731
          %v1739 = vadd.f32 %v1724, %v1731
          %v1740 = vadd.f32 %v1725, %v1731
          %1741 = vst [vmem:[%s616] sm:$0xff] %v1733
          %1742 = vst [vmem:[%s616 + $0x8] sm:$0xff] %v1734
          %1743 = vst [vmem:[%s616 + $0x10] sm:$0xff] %v1735
          %1744 = vst [vmem:[%s616 + $0x18] sm:$0xff] %v1736
          %1745 = vst [vmem:[%s616 + $0x20] sm:$0xff] %v1737
          %1746 = vst [vmem:[%s616 + $0x28] sm:$0xff] %v1738
          %1747 = vst [vmem:[%s616 + $0x30] sm:$0xff] %v1739
          %1748 = vst [vmem:[%s616 + $0x38] sm:$0xff] %v1740
        $region146: #{_attention_forward.3} parent=129 // pred_fallthru
          _
        %s1749 = sand.u32 %s262, 1
        %s1750 = scalar_lea.sflag [#allocation9], %s1749
        %s1751 = sand.u32 %s262, 1
        %s1752 = smul.addr %s1751, 64
        %s1753 = scalar_lea.vmem [#allocation8], %s1752
        // Predicated region
        $region147: #{_attention_forward.3} parent=129 // pred_check
          %p1754 = pneg %p272
        $region148: #{_attention_forward.3} parent=129 // pred_check_branch
          %1756 = sbr.rel (%p1754) target = $region150
        $region149: #{_attention_forward.3} parent=129 // pred_region
          %s1757 = smul.u32 8, %s29
          %s1759 = ssub.s32 1024, 1024
          %1760 = vsyncadd %s1750, %s1759
          %s1761 = smul.addr %s28, 16
          %s1762 = sadd.s32 %s1757, %s1761
          %s1763 = smul.addr %s1762, 128
          %s1764 = scalar_lea.hbm %s9, %s1763
          %s1765 = sshll.u32 %s1753, 4
          %s1766 = int_to_ptr.vmem [resolvable:$true] %s1765
          %1771 = dma.vmem_to_hbm [thread:$0]  %s1766, 1024, %s1764, %s1750, 128, 128, 8
        $region150: #{_attention_forward.3} parent=129 // pred_fallthru
          _
      $region130: #{_attention_forward.3} parent=5 // pred_fallthru
        _
      %p1772 = scmp.le.s32.totalorder 2, %s18
      // Predicated region
      $region151: #{_attention_forward.3} parent=5 // pred_check
        %p1773 = pneg %p1772
      $region152: #{_attention_forward.3} parent=5 // pred_check_branch
        %1775 = sbr.rel (%p1773) target = $region154
      $region153: #{_attention_forward.3} parent=5 // pred_region
        %s1776 = ssub.s32 %s18, 2
        // Predicated region
        $region155: #{_attention_forward.3} parent=153 // pred_check
          %p1777 = pneg %p278
        $region156: #{_attention_forward.3} parent=153 // pred_check_branch
          %1779 = sbr.rel (%p1777) target = $region158
        $region157: #{_attention_forward.3} parent=153 // pred_region
          %s1780 = sand.u32 %s263, 1
          %s1781 = scalar_lea.sflag [#allocation9], %s1780
          %s1782 = sand.u32 %s263, 1
          %s1783 = smul.addr %s1782, 64
          %s1784 = scalar_lea.vmem [#allocation8], %s1783
          %1785 = dma.done %s1781, 1024
        $region158: #{_attention_forward.3} parent=153 // pred_fallthru
          _
      $region154: #{_attention_forward.3} parent=5 // pred_fallthru
        _
    $region6: #{_attention_forward.3} parent=1 // loop_footer
      %s22 = sadd.s32 1, %s18
    $region7: #{_attention_forward.3} parent=1 // loop_footer_branch
      %17 = sbr.rel target = $region3
    $region8: #{_attention_forward.3} parent=1 // loop_exit
      _
    %1786 = vsyncpa [#allocation9], 1
    %s1787 = scalar_lea.sflag [#allocation9], 1
    %1788 = vsyncpa %s1787, 1

</llo_original>
